<compile_context>
chip_gen: v5e
topology: v5e:2x2
jax: 0.10.0
libtpu: 0.0.40
codegen_flags: <defaults>
</compile_context>

<pallas_src>
import functools
import math

import jax
import jax.numpy as jnp
from jax.experimental import pallas as pl
from jax.experimental.pallas import tpu as pltpu

VMEM = pltpu.MemorySpace.VMEM


# ------------------------------ in-kernel helpers ------------------------------

def _ln(x, g, b, eps):
    mu = jnp.mean(x, axis=-1, keepdims=True)
    var = jnp.mean(jnp.square(x - mu), axis=-1, keepdims=True)
    return (x - mu) * jax.lax.rsqrt(var + eps) * g + b


def _erf(x):
    # Abramowitz & Stegun 7.1.26 (|err| <= 1.5e-7): erf built from exp (EUP) + polynomial
    # (VPU) only, so we don't depend on an erf primitive lowering in Mosaic.
    p = 0.3275911
    a1, a2, a3, a4, a5 = 0.254829592, -0.284496736, 1.421413741, -1.453152027, 1.061405429
    sgn = jnp.where(x >= 0.0, 1.0, -1.0)
    ax = jnp.abs(x)
    t = 1.0 / (1.0 + p * ax)
    poly = ((((a5 * t + a4) * t + a3) * t + a2) * t + a1) * t
    return sgn * (1.0 - poly * jnp.exp(-ax * ax))


def _gelu_exact(x):
    # PyTorch nn.GELU() default (exact erf formulation), not the tanh approximation.
    return 0.5 * x * (1.0 + _erf(x * 0.7071067811865476))


# ------------------------------ fused forward kernel ---------------------------

def _mybert_kernel(h0_ref, bias_ref, emb_g_ref, emb_b_ref,
                   qkv_w_ref, qkv_b_ref, o_w_ref, o_b_ref,
                   ln1_g_ref, ln1_b_ref, i_w_ref, i_b_ref, f_w_ref, f_b_ref,
                   ln2_g_ref, ln2_b_ref,
                   p_w_ref, p_b_ref, c_w_ref, c_b_ref,
                   logits_ref,
                   *, B, S, nH, dh, L, eps):
    H = nH * dh
    bias = bias_ref[...]                                             # [T, T] f32 (built once)

    # embedding LayerNorm (f32)
    h = _ln(h0_ref[...], emb_g_ref[...], emb_b_ref[...], eps)       # [T, H] f32

    # encoder layers: weights are stacked along a leading L axis and stay VMEM-resident
    for l in range(L):
        # fused QKV projection; 1/sqrt(dh) was pre-folded into the Q slice of qkv_w/qkv_b
        qkv = jnp.dot(h.astype(jnp.bfloat16), qkv_w_ref[l],
                      preferred_element_type=jnp.float32) + qkv_b_ref[l]        # [T, 3H]

        # one explicit f32 transpose of the K block per layer: per-head K^T slices become
        # cheap sublane slices instead of per-head implicit transposes/relayouts.
        kT = jnp.transpose(qkv[:, H:2 * H])                                      # [H, T] f32

        ctxs = []
        for hh in range(nH):
            q = qkv[:, hh * dh:(hh + 1) * dh].astype(jnp.bfloat16)               # [T, dh]
            kt = kT[hh * dh:(hh + 1) * dh, :].astype(jnp.bfloat16)               # [dh, T]
            v = qkv[:, 2 * H + hh * dh:2 * H + (hh + 1) * dh].astype(jnp.bfloat16)

            s = jnp.dot(q, kt, preferred_element_type=jnp.float32) + bias        # [T, T]
            m = jnp.max(s, axis=-1, keepdims=True)
            p = jnp.exp(s - m)
            p = p * (1.0 / jnp.sum(p, axis=-1, keepdims=True))   # exact recip ([T,1] is free)
            ctxs.append(jnp.dot(p.astype(jnp.bfloat16), v,
                                preferred_element_type=jnp.float32))              # [T, dh]

        # head-merge via lane concat + ONE output-projection matmul; SSA value, no scratch
        ctx = jnp.concatenate(ctxs, axis=-1)                                       # [T, H]
        attn = jnp.dot(ctx.astype(jnp.bfloat16), o_w_ref[l],
                       preferred_element_type=jnp.float32) + o_b_ref[l]

        # residual + LayerNorm 1
        h1 = _ln(h + attn, ln1_g_ref[l], ln1_b_ref[l], eps)

        # FFN (bf16 MXU matmuls, f32 accumulation, exact GELU)
        ff = jnp.dot(h1.astype(jnp.bfloat16), i_w_ref[l],
                     preferred_element_type=jnp.float32) + i_b_ref[l]
        ff = _gelu_exact(ff)
        ff = jnp.dot(ff.astype(jnp.bfloat16), f_w_ref[l],
                     preferred_element_type=jnp.float32) + f_b_ref[l]

        # residual + LayerNorm 2
        h = _ln(h1 + ff, ln2_g_ref[l], ln2_b_ref[l], eps)

    # pooler: tanh(Linear(h[CLS])) on the first token of each sequence, then classifier
    cls_rows = jnp.concatenate([h[b * S:b * S + 1, :] for b in range(B)], axis=0)  # [B, H]
    pooled = jnp.tanh(jnp.dot(cls_rows.astype(jnp.bfloat16), p_w_ref[...],
                              preferred_element_type=jnp.float32) + p_b_ref[...])
    logits = jnp.dot(pooled.astype(jnp.bfloat16), c_w_ref[...],
                     preferred_element_type=jnp.float32) + c_b_ref[...]
    logits_ref[...] = logits.astype(logits_ref.dtype)


# ------------------------------ one-time weight prep ----------------------------

def prepare_params(params, cfg):
    """One-time parameter preparation (runs once, outside the jitted forward):
    QKV concat, 1/sqrt(dh) folding into Q (0.25 = exact power of two), bf16 casts of all
    matmul weights, bias reshapes to [1, N], and stacking per-layer tensors along L."""
    H, I = cfg["hidden"], cfg["intermediate"]
    dh = H // cfg["num_heads"]
    scale = 1.0 / math.sqrt(dh)
    Ls = params["layers"]

    def stack(fn, dtype=jnp.float32):
        return jnp.stack([fn(lp) for lp in Ls]).astype(dtype)

    return {
        "word_emb": params["word_emb"],
        "pos_emb": params["pos_emb"],
        "type_emb": params["type_emb"],
        "emb_ln_g": params["emb_ln_g"].reshape(1, H),
        "emb_ln_b": params["emb_ln_b"].reshape(1, H),
        "qkv_w": stack(lambda lp: jnp.concatenate(
            [lp["q_w"] * scale, lp["k_w"], lp["v_w"]], axis=1), jnp.bfloat16),  # [L, H, 3H]
        "qkv_b": stack(lambda lp: jnp.concatenate(
            [lp["q_b"] * scale, lp["k_b"], lp["v_b"]]).reshape(1, 3 * H)),      # [L, 1, 3H]
        "o_w": stack(lambda lp: lp["o_w"], jnp.bfloat16),                        # [L, H, H]
        "o_b": stack(lambda lp: lp["o_b"].reshape(1, H)),
        "ln1_g": stack(lambda lp: lp["ln1_g"].reshape(1, H)),
        "ln1_b": stack(lambda lp: lp["ln1_b"].reshape(1, H)),
        "i_w": stack(lambda lp: lp["i_w"], jnp.bfloat16),                        # [L, H, I]
        "i_b": stack(lambda lp: lp["i_b"].reshape(1, I)),
        "f_w": stack(lambda lp: lp["f_w"], jnp.bfloat16),                        # [L, I, H]
        "f_b": stack(lambda lp: lp["f_b"].reshape(1, H)),
        "ln2_g": stack(lambda lp: lp["ln2_g"].reshape(1, H)),
        "ln2_b": stack(lambda lp: lp["ln2_b"].reshape(1, H)),
        "pooler_w": params["pooler_w"].astype(jnp.bfloat16),
        "pooler_b": params["pooler_b"].reshape(1, H),
        "cls_w": params["cls_w"].astype(jnp.bfloat16),
        "cls_b": params["cls_b"].reshape(1, 2),
    }


# ---------------------------------- model (glue) --------------------------------

CFG = dict(
    vocab_size=30,
    hidden=32,
    num_heads=2,
    num_layers=2,
    intermediate=64,
    max_pos=16,
    pad_id=0,          # vocab['[PAD]'] == 0
)


def init_params(key, cfg):
    H, I = cfg["hidden"], cfg["intermediate"]

    def nrm(k, shape):
        return 0.02 * jax.random.normal(k, shape, dtype=jnp.float32)

    keys = iter(jax.random.split(key, 64))
    p = {
        "word_emb": nrm(next(keys), (cfg["vocab_size"], H)),
        "pos_emb": nrm(next(keys), (cfg["max_pos"], H)),
        "type_emb": nrm(next(keys), (2, H)),
        "emb_ln_g": jnp.ones((H,), jnp.float32),
        "emb_ln_b": jnp.zeros((H,), jnp.float32),
        "layers": [],
        "pooler_w": nrm(next(keys), (H, H)),
        "pooler_b": jnp.zeros((H,), jnp.float32),
        "cls_w": nrm(next(keys), (H, 2)),
        "cls_b": jnp.zeros((2,), jnp.float32),
    }
    for _ in range(cfg["num_layers"]):
        p["layers"].append({
            "q_w": nrm(next(keys), (H, H)), "q_b": jnp.zeros((H,), jnp.float32),
            "k_w": nrm(next(keys), (H, H)), "k_b": jnp.zeros((H,), jnp.float32),
            "v_w": nrm(next(keys), (H, H)), "v_b": jnp.zeros((H,), jnp.float32),
            "o_w": nrm(next(keys), (H, H)), "o_b": jnp.zeros((H,), jnp.float32),
            "ln1_g": jnp.ones((H,), jnp.float32), "ln1_b": jnp.zeros((H,), jnp.float32),
            "i_w": nrm(next(keys), (H, I)), "i_b": jnp.zeros((I,), jnp.float32),
            "f_w": nrm(next(keys), (I, H)), "f_b": jnp.zeros((H,), jnp.float32),
            "ln2_g": jnp.ones((H,), jnp.float32), "ln2_b": jnp.zeros((H,), jnp.float32),
        })
    return p


def mybert_forward(input_ids, prep, cfg):
    B, S = input_ids.shape
    H, nH, L = cfg["hidden"], cfg["num_heads"], cfg["num_layers"]
    T = B * S

    # plain-JAX glue: pad mask -> block-diagonal(+pad) additive attention bias [T, T]
    # (tiny: 16x16 f32; the per-head [B*nH,S,S] bias is never materialized).
    mask = (input_ids != cfg["pad_id"]).astype(jnp.float32)                     # [B, S]
    batch_id = jnp.arange(T, dtype=jnp.int32) // S
    same_batch = batch_id[:, None] == batch_id[None, :]
    bias = jnp.where(same_batch & (mask.reshape(T) > 0.5)[None, :],
                     0.0, -10000.0).astype(jnp.float32)                          # [T, T]

    # embeddings (gathers = plain-JAX glue); token_type_ids assumed all-zero (BERT default)
    h0 = (prep["word_emb"][input_ids]
          + prep["pos_emb"][jnp.arange(S)][None, :, :]
          + prep["type_emb"][0][None, None, :]).reshape(T, H)                    # [T, H]

    kernel = functools.partial(_mybert_kernel, B=B, S=S, nH=nH,
                               dh=H // nH, L=L, eps=1e-12)
    return pl.pallas_call(
        kernel,
        in_specs=[pl.BlockSpec(memory_space=VMEM)] * 20,
        out_specs=pl.BlockSpec(memory_space=VMEM),
        out_shape=jax.ShapeDtypeStruct((B, 2), jnp.float32),
    )(h0, bias, prep["emb_ln_g"], prep["emb_ln_b"],
      prep["qkv_w"], prep["qkv_b"], prep["o_w"], prep["o_b"],
      prep["ln1_g"], prep["ln1_b"], prep["i_w"], prep["i_b"],
      prep["f_w"], prep["f_b"], prep["ln2_g"], prep["ln2_b"],
      prep["pooler_w"], prep["pooler_b"], prep["cls_w"], prep["cls_b"])


# ------------------------------------- main --------------------------------------

if __name__ == "__main__":
    key = jax.random.PRNGKey(0)
    pkey, dkey = jax.random.split(key)

    params = init_params(pkey, CFG)
    prep = prepare_params(params, CFG)      # one-time weight prep (outside jit / forward)

    B, S = 2, 8
    input_ids = jax.random.randint(dkey, (B, S), 1, CFG["vocab_size"], dtype=jnp.int32)
    # pad the tail of the second sequence to exercise the attention mask
    input_ids = input_ids.at[1, 5:].set(CFG["pad_id"])

    forward = jax.jit(functools.partial(mybert_forward, cfg=CFG))
    logits = forward(input_ids, prep)
    jax.block_until_ready(logits)
    assert logits.shape == (B, 2) and logits.dtype == jnp.float32
    print("KERNEL_OK")
</pallas_src>

<mosaic_0001>
module attributes {stable_mosaic.version = 11 : i64} {
  func.func @_mybert_kernel(%arg0: memref<16x32xf32, #tpu.memory_space<vmem>>, %arg1: memref<16x16xf32, #tpu.memory_space<vmem>>, %arg2: memref<1x32xf32, #tpu.memory_space<vmem>>, %arg3: memref<1x32xf32, #tpu.memory_space<vmem>>, %arg4: memref<2x32x96xbf16, #tpu.memory_space<vmem>>, %arg5: memref<2x1x96xf32, #tpu.memory_space<vmem>>, %arg6: memref<2x32x32xbf16, #tpu.memory_space<vmem>>, %arg7: memref<2x1x32xf32, #tpu.memory_space<vmem>>, %arg8: memref<2x1x32xf32, #tpu.memory_space<vmem>>, %arg9: memref<2x1x32xf32, #tpu.memory_space<vmem>>, %arg10: memref<2x32x64xbf16, #tpu.memory_space<vmem>>, %arg11: memref<2x1x64xf32, #tpu.memory_space<vmem>>, %arg12: memref<2x64x32xbf16, #tpu.memory_space<vmem>>, %arg13: memref<2x1x32xf32, #tpu.memory_space<vmem>>, %arg14: memref<2x1x32xf32, #tpu.memory_space<vmem>>, %arg15: memref<2x1x32xf32, #tpu.memory_space<vmem>>, %arg16: memref<32x32xbf16, #tpu.memory_space<vmem>>, %arg17: memref<1x32xf32, #tpu.memory_space<vmem>>, %arg18: memref<32x2xbf16, #tpu.memory_space<vmem>>, %arg19: memref<1x2xf32, #tpu.memory_space<vmem>>, %arg20: memref<2x2xf32, #tpu.memory_space<vmem>>) attributes {dimension_semantics = [], scalar_prefetch = 0 : i64, scratch_operands = 0 : i64, tpu.core_type = #tpu.core_type<tc>} {
    %c0 = arith.constant 0 : index
    %c0_0 = arith.constant 0 : index
    %0 = vector.load %arg1[%c0, %c0_0] : memref<16x16xf32, #tpu.memory_space<vmem>>, vector<16x16xf32>
    %c0_1 = arith.constant 0 : index
    %c0_2 = arith.constant 0 : index
    %1 = vector.load %arg0[%c0_1, %c0_2] : memref<16x32xf32, #tpu.memory_space<vmem>>, vector<16x32xf32>
    %c0_3 = arith.constant 0 : index
    %c0_4 = arith.constant 0 : index
    %2 = vector.load %arg2[%c0_3, %c0_4] : memref<1x32xf32, #tpu.memory_space<vmem>>, vector<1x32xf32>
    %c0_5 = arith.constant 0 : index
    %c0_6 = arith.constant 0 : index
    %3 = vector.load %arg3[%c0_5, %c0_6] : memref<1x32xf32, #tpu.memory_space<vmem>>, vector<1x32xf32>
    %cst = arith.constant dense<0.000000e+00> : vector<16xf32>
    %4 = vector.multi_reduction <add>, %1, %cst [1] : vector<16x32xf32> to vector<16xf32>
    %5 = vector.shape_cast %4 : vector<16xf32> to vector<16x1xf32>
    %cst_7 = arith.constant 3.200000e+01 : f32
    %6 = vector.broadcast %cst_7 : f32 to vector<16x1xf32>
    %7 = arith.divf %5, %6 : vector<16x1xf32>
    %8 = vector.broadcast %7 : vector<16x1xf32> to vector<16x32xf32>
    %9 = arith.subf %1, %8 : vector<16x32xf32>
    %10 = arith.mulf %9, %9 : vector<16x32xf32>
    %cst_8 = arith.constant dense<0.000000e+00> : vector<16xf32>
    %11 = vector.multi_reduction <add>, %10, %cst_8 [1] : vector<16x32xf32> to vector<16xf32>
    %12 = vector.shape_cast %11 : vector<16xf32> to vector<16x1xf32>
    %cst_9 = arith.constant 3.200000e+01 : f32
    %13 = vector.broadcast %cst_9 : f32 to vector<16x1xf32>
    %14 = arith.divf %12, %13 : vector<16x1xf32>
    %15 = vector.broadcast %7 : vector<16x1xf32> to vector<16x32xf32>
    %16 = arith.subf %1, %15 : vector<16x32xf32>
    %cst_10 = arith.constant 9.99999996E-13 : f32
    %17 = vector.broadcast %cst_10 : f32 to vector<16x1xf32>
    %18 = arith.addf %14, %17 : vector<16x1xf32>
    %19 = math.rsqrt %18 : vector<16x1xf32>
    %20 = vector.broadcast %19 : vector<16x1xf32> to vector<16x32xf32>
    %21 = arith.mulf %16, %20 : vector<16x32xf32>
    %22 = vector.broadcast %2 : vector<1x32xf32> to vector<16x32xf32>
    %23 = arith.mulf %21, %22 : vector<16x32xf32>
    %24 = vector.broadcast %3 : vector<1x32xf32> to vector<16x32xf32>
    %25 = arith.addf %23, %24 : vector<16x32xf32>
    %26 = arith.truncf %25 : vector<16x32xf32> to vector<16x32xbf16>
    %c0_11 = arith.constant 0 : index
    %c0_12 = arith.constant 0 : index
    %c0_13 = arith.constant 0 : index
    %27 = vector.load %arg4[%c0_11, %c0_12, %c0_13] : memref<2x32x96xbf16, #tpu.memory_space<vmem>>, vector<1x32x96xbf16>
    %28 = vector.shape_cast %27 : vector<1x32x96xbf16> to vector<32x96xbf16>
    %cst_14 = arith.constant dense<0.000000e+00> : vector<16x96xf32>
    %29 = tpu.matmul %26, %28, %cst_14 {dimension_numbers = #tpu.dot_dimension_numbers<[1], [0], [0], [1], [0, 0, 1, 1], [], []>} : vector<16x32xbf16>, vector<32x96xbf16>, vector<16x96xf32> -> vector<16x96xf32>
    %c0_15 = arith.constant 0 : index
    %c0_16 = arith.constant 0 : index
    %c0_17 = arith.constant 0 : index
    %30 = vector.load %arg5[%c0_15, %c0_16, %c0_17] : memref<2x1x96xf32, #tpu.memory_space<vmem>>, vector<1x1x96xf32>
    %31 = vector.shape_cast %30 : vector<1x1x96xf32> to vector<1x96xf32>
    %32 = vector.broadcast %31 : vector<1x96xf32> to vector<16x96xf32>
    %33 = arith.addf %29, %32 : vector<16x96xf32>
    %34 = vector.extract_strided_slice %33 {offsets = [0, 32], sizes = [16, 32], strides = [1, 1]} : vector<16x96xf32> to vector<16x32xf32>
    %35 = tpu.transpose %34, [1, 0] : vector<16x32xf32> -> vector<32x16xf32>
    %36 = vector.extract_strided_slice %33 {offsets = [0, 0], sizes = [16, 16], strides = [1, 1]} : vector<16x96xf32> to vector<16x16xf32>
    %37 = arith.truncf %36 : vector<16x16xf32> to vector<16x16xbf16>
    %38 = vector.extract_strided_slice %35 {offsets = [0, 0], sizes = [16, 16], strides = [1, 1]} : vector<32x16xf32> to vector<16x16xf32>
    %39 = arith.truncf %38 : vector<16x16xf32> to vector<16x16xbf16>
    %40 = vector.extract_strided_slice %33 {offsets = [0, 64], sizes = [16, 16], strides = [1, 1]} : vector<16x96xf32> to vector<16x16xf32>
    %41 = arith.truncf %40 : vector<16x16xf32> to vector<16x16xbf16>
    %cst_18 = arith.constant dense<0.000000e+00> : vector<16x16xf32>
    %42 = tpu.matmul %37, %39, %cst_18 {dimension_numbers = #tpu.dot_dimension_numbers<[1], [0], [0], [1], [0, 0, 1, 1], [], []>} : vector<16x16xbf16>, vector<16x16xbf16>, vector<16x16xf32> -> vector<16x16xf32>
    %43 = arith.addf %42, %0 : vector<16x16xf32>
    %cst_19 = arith.constant dense<0xFF800000> : vector<16xf32>
    %44 = vector.multi_reduction <maximumf>, %43, %cst_19 [1] : vector<16x16xf32> to vector<16xf32>
    %45 = vector.shape_cast %44 : vector<16xf32> to vector<16x1xf32>
    %46 = vector.broadcast %45 : vector<16x1xf32> to vector<16x16xf32>
    %47 = arith.subf %43, %46 : vector<16x16xf32>
    %48 = math.exp %47 : vector<16x16xf32>
    %cst_20 = arith.constant dense<0.000000e+00> : vector<16xf32>
    %49 = vector.multi_reduction <add>, %48, %cst_20 [1] : vector<16x16xf32> to vector<16xf32>
    %50 = vector.shape_cast %49 : vector<16xf32> to vector<16x1xf32>
    %cst_21 = arith.constant 1.000000e+00 : f32
    %51 = vector.broadcast %cst_21 : f32 to vector<16x1xf32>
    %52 = arith.divf %51, %50 : vector<16x1xf32>
    %53 = vector.broadcast %52 : vector<16x1xf32> to vector<16x16xf32>
    %54 = arith.mulf %48, %53 : vector<16x16xf32>
    %55 = arith.truncf %54 : vector<16x16xf32> to vector<16x16xbf16>
    %cst_22 = arith.constant dense<0.000000e+00> : vector<16x16xf32>
    %56 = tpu.matmul %55, %41, %cst_22 {dimension_numbers = #tpu.dot_dimension_numbers<[1], [0], [0], [1], [0, 0, 1, 1], [], []>} : vector<16x16xbf16>, vector<16x16xbf16>, vector<16x16xf32> -> vector<16x16xf32>
    %57 = vector.extract_strided_slice %33 {offsets = [0, 16], sizes = [16, 16], strides = [1, 1]} : vector<16x96xf32> to vector<16x16xf32>
    %58 = arith.truncf %57 : vector<16x16xf32> to vector<16x16xbf16>
    %59 = vector.extract_strided_slice %35 {offsets = [16, 0], sizes = [16, 16], strides = [1, 1]} : vector<32x16xf32> to vector<16x16xf32>
    %60 = arith.truncf %59 : vector<16x16xf32> to vector<16x16xbf16>
    %61 = vector.extract_strided_slice %33 {offsets = [0, 80], sizes = [16, 16], strides = [1, 1]} : vector<16x96xf32> to vector<16x16xf32>
    %62 = arith.truncf %61 : vector<16x16xf32> to vector<16x16xbf16>
    %cst_23 = arith.constant dense<0.000000e+00> : vector<16x16xf32>
    %63 = tpu.matmul %58, %60, %cst_23 {dimension_numbers = #tpu.dot_dimension_numbers<[1], [0], [0], [1], [0, 0, 1, 1], [], []>} : vector<16x16xbf16>, vector<16x16xbf16>, vector<16x16xf32> -> vector<16x16xf32>
    %64 = arith.addf %63, %0 : vector<16x16xf32>
    %cst_24 = arith.constant dense<0xFF800000> : vector<16xf32>
    %65 = vector.multi_reduction <maximumf>, %64, %cst_24 [1] : vector<16x16xf32> to vector<16xf32>
    %66 = vector.shape_cast %65 : vector<16xf32> to vector<16x1xf32>
    %67 = vector.broadcast %66 : vector<16x1xf32> to vector<16x16xf32>
    %68 = arith.subf %64, %67 : vector<16x16xf32>
    %69 = math.exp %68 : vector<16x16xf32>
    %cst_25 = arith.constant dense<0.000000e+00> : vector<16xf32>
    %70 = vector.multi_reduction <add>, %69, %cst_25 [1] : vector<16x16xf32> to vector<16xf32>
    %71 = vector.shape_cast %70 : vector<16xf32> to vector<16x1xf32>
    %cst_26 = arith.constant 1.000000e+00 : f32
    %72 = vector.broadcast %cst_26 : f32 to vector<16x1xf32>
    %73 = arith.divf %72, %71 : vector<16x1xf32>
    %74 = vector.broadcast %73 : vector<16x1xf32> to vector<16x16xf32>
    %75 = arith.mulf %69, %74 : vector<16x16xf32>
    %76 = arith.truncf %75 : vector<16x16xf32> to vector<16x16xbf16>
    %cst_27 = arith.constant dense<0.000000e+00> : vector<16x16xf32>
    %77 = tpu.matmul %76, %62, %cst_27 {dimension_numbers = #tpu.dot_dimension_numbers<[1], [0], [0], [1], [0, 0, 1, 1], [], []>} : vector<16x16xbf16>, vector<16x16xbf16>, vector<16x16xf32> -> vector<16x16xf32>
    %78 = tpu.concatenate %56, %77 in 1 : vector<16x16xf32>, vector<16x16xf32> -> vector<16x32xf32>
    %79 = arith.truncf %78 : vector<16x32xf32> to vector<16x32xbf16>
    %c0_28 = arith.constant 0 : index
    %c0_29 = arith.constant 0 : index
    %c0_30 = arith.constant 0 : index
    %80 = vector.load %arg6[%c0_28, %c0_29, %c0_30] : memref<2x32x32xbf16, #tpu.memory_space<vmem>>, vector<1x32x32xbf16>
    %81 = vector.shape_cast %80 : vector<1x32x32xbf16> to vector<32x32xbf16>
    %cst_31 = arith.constant dense<0.000000e+00> : vector<16x32xf32>
    %82 = tpu.matmul %79, %81, %cst_31 {dimension_numbers = #tpu.dot_dimension_numbers<[1], [0], [0], [1], [0, 0, 1, 1], [], []>} : vector<16x32xbf16>, vector<32x32xbf16>, vector<16x32xf32> -> vector<16x32xf32>
    %c0_32 = arith.constant 0 : index
    %c0_33 = arith.constant 0 : index
    %c0_34 = arith.constant 0 : index
    %83 = vector.load %arg7[%c0_32, %c0_33, %c0_34] : memref<2x1x32xf32, #tpu.memory_space<vmem>>, vector<1x1x32xf32>
    %84 = vector.shape_cast %83 : vector<1x1x32xf32> to vector<1x32xf32>
    %85 = vector.broadcast %84 : vector<1x32xf32> to vector<16x32xf32>
    %86 = arith.addf %82, %85 : vector<16x32xf32>
    %87 = arith.addf %25, %86 : vector<16x32xf32>
    %c0_35 = arith.constant 0 : index
    %c0_36 = arith.constant 0 : index
    %c0_37 = arith.constant 0 : index
    %88 = vector.load %arg8[%c0_35, %c0_36, %c0_37] : memref<2x1x32xf32, #tpu.memory_space<vmem>>, vector<1x1x32xf32>
    %89 = vector.shape_cast %88 : vector<1x1x32xf32> to vector<1x32xf32>
    %c0_38 = arith.constant 0 : index
    %c0_39 = arith.constant 0 : index
    %c0_40 = arith.constant 0 : index
    %90 = vector.load %arg9[%c0_38, %c0_39, %c0_40] : memref<2x1x32xf32, #tpu.memory_space<vmem>>, vector<1x1x32xf32>
    %91 = vector.shape_cast %90 : vector<1x1x32xf32> to vector<1x32xf32>
    %cst_41 = arith.constant dense<0.000000e+00> : vector<16xf32>
    %92 = vector.multi_reduction <add>, %87, %cst_41 [1] : vector<16x32xf32> to vector<16xf32>
    %93 = vector.shape_cast %92 : vector<16xf32> to vector<16x1xf32>
    %cst_42 = arith.constant 3.200000e+01 : f32
    %94 = vector.broadcast %cst_42 : f32 to vector<16x1xf32>
    %95 = arith.divf %93, %94 : vector<16x1xf32>
    %96 = vector.broadcast %95 : vector<16x1xf32> to vector<16x32xf32>
    %97 = arith.subf %87, %96 : vector<16x32xf32>
    %98 = arith.mulf %97, %97 : vector<16x32xf32>
    %cst_43 = arith.constant dense<0.000000e+00> : vector<16xf32>
    %99 = vector.multi_reduction <add>, %98, %cst_43 [1] : vector<16x32xf32> to vector<16xf32>
    %100 = vector.shape_cast %99 : vector<16xf32> to vector<16x1xf32>
    %cst_44 = arith.constant 3.200000e+01 : f32
    %101 = vector.broadcast %cst_44 : f32 to vector<16x1xf32>
    %102 = arith.divf %100, %101 : vector<16x1xf32>
    %103 = vector.broadcast %95 : vector<16x1xf32> to vector<16x32xf32>
    %104 = arith.subf %87, %103 : vector<16x32xf32>
    %cst_45 = arith.constant 9.99999996E-13 : f32
    %105 = vector.broadcast %cst_45 : f32 to vector<16x1xf32>
    %106 = arith.addf %102, %105 : vector<16x1xf32>
    %107 = math.rsqrt %106 : vector<16x1xf32>
    %108 = vector.broadcast %107 : vector<16x1xf32> to vector<16x32xf32>
    %109 = arith.mulf %104, %108 : vector<16x32xf32>
    %110 = vector.broadcast %89 : vector<1x32xf32> to vector<16x32xf32>
    %111 = arith.mulf %109, %110 : vector<16x32xf32>
    %112 = vector.broadcast %91 : vector<1x32xf32> to vector<16x32xf32>
    %113 = arith.addf %111, %112 : vector<16x32xf32>
    %114 = arith.truncf %113 : vector<16x32xf32> to vector<16x32xbf16>
    %c0_46 = arith.constant 0 : index
    %c0_47 = arith.constant 0 : index
    %c0_48 = arith.constant 0 : index
    %115 = vector.load %arg10[%c0_46, %c0_47, %c0_48] : memref<2x32x64xbf16, #tpu.memory_space<vmem>>, vector<1x32x64xbf16>
    %116 = vector.shape_cast %115 : vector<1x32x64xbf16> to vector<32x64xbf16>
    %cst_49 = arith.constant dense<0.000000e+00> : vector<16x64xf32>
    %117 = tpu.matmul %114, %116, %cst_49 {dimension_numbers = #tpu.dot_dimension_numbers<[1], [0], [0], [1], [0, 0, 1, 1], [], []>} : vector<16x32xbf16>, vector<32x64xbf16>, vector<16x64xf32> -> vector<16x64xf32>
    %c0_50 = arith.constant 0 : index
    %c0_51 = arith.constant 0 : index
    %c0_52 = arith.constant 0 : index
    %118 = vector.load %arg11[%c0_50, %c0_51, %c0_52] : memref<2x1x64xf32, #tpu.memory_space<vmem>>, vector<1x1x64xf32>
    %119 = vector.shape_cast %118 : vector<1x1x64xf32> to vector<1x64xf32>
    %120 = vector.broadcast %119 : vector<1x64xf32> to vector<16x64xf32>
    %121 = arith.addf %117, %120 : vector<16x64xf32>
    %cst_53 = arith.constant 5.000000e-01 : f32
    %122 = vector.broadcast %cst_53 : f32 to vector<16x64xf32>
    %123 = arith.mulf %122, %121 : vector<16x64xf32>
    %cst_54 = arith.constant 0.707106769 : f32
    %124 = vector.broadcast %cst_54 : f32 to vector<16x64xf32>
    %125 = arith.mulf %121, %124 : vector<16x64xf32>
    %cst_55 = arith.constant 0.000000e+00 : f32
    %126 = vector.broadcast %cst_55 : f32 to vector<16x64xf32>
    %127 = arith.cmpf oge, %125, %126 : vector<16x64xf32>
    %cst_56 = arith.constant 1.000000e+00 : f32
    %cst_57 = arith.constant -1.000000e+00 : f32
    %128 = vector.broadcast %cst_56 : f32 to vector<16x64xf32>
    %129 = vector.broadcast %cst_57 : f32 to vector<16x64xf32>
    %130 = arith.select %127, %128, %129 : vector<16x64xi1>, vector<16x64xf32>
    %131 = math.absf %125 : vector<16x64xf32>
    %cst_58 = arith.constant 0.327591091 : f32
    %132 = vector.broadcast %cst_58 : f32 to vector<16x64xf32>
    %133 = arith.mulf %132, %131 : vector<16x64xf32>
    %cst_59 = arith.constant 1.000000e+00 : f32
    %134 = vector.broadcast %cst_59 : f32 to vector<16x64xf32>
    %135 = arith.addf %134, %133 : vector<16x64xf32>
    %cst_60 = arith.constant 1.000000e+00 : f32
    %136 = vector.broadcast %cst_60 : f32 to vector<16x64xf32>
    %137 = arith.divf %136, %135 : vector<16x64xf32>
    %cst_61 = arith.constant 1.06140542 : f32
    %138 = vector.broadcast %cst_61 : f32 to vector<16x64xf32>
    %139 = arith.mulf %138, %137 : vector<16x64xf32>
    %cst_62 = arith.constant -1.45315206 : f32
    %140 = vector.broadcast %cst_62 : f32 to vector<16x64xf32>
    %141 = arith.addf %139, %140 : vector<16x64xf32>
    %142 = arith.mulf %141, %137 : vector<16x64xf32>
    %cst_63 = arith.constant 1.42141378 : f32
    %143 = vector.broadcast %cst_63 : f32 to vector<16x64xf32>
    %144 = arith.addf %142, %143 : vector<16x64xf32>
    %145 = arith.mulf %144, %137 : vector<16x64xf32>
    %cst_64 = arith.constant -0.284496725 : f32
    %146 = vector.broadcast %cst_64 : f32 to vector<16x64xf32>
    %147 = arith.addf %145, %146 : vector<16x64xf32>
    %148 = arith.mulf %147, %137 : vector<16x64xf32>
    %cst_65 = arith.constant 0.254829586 : f32
    %149 = vector.broadcast %cst_65 : f32 to vector<16x64xf32>
    %150 = arith.addf %148, %149 : vector<16x64xf32>
    %151 = arith.mulf %150, %137 : vector<16x64xf32>
    %cst_66 = arith.constant 0.000000e+00 : f32
    %152 = vector.broadcast %cst_66 : f32 to vector<16x64xf32>
    %153 = arith.subf %152, %131 : vector<16x64xf32>
    %154 = arith.mulf %153, %131 : vector<16x64xf32>
    %155 = math.exp %154 : vector<16x64xf32>
    %156 = arith.mulf %151, %155 : vector<16x64xf32>
    %cst_67 = arith.constant 1.000000e+00 : f32
    %157 = vector.broadcast %cst_67 : f32 to vector<16x64xf32>
    %158 = arith.subf %157, %156 : vector<16x64xf32>
    %159 = arith.mulf %130, %158 : vector<16x64xf32>
    %cst_68 = arith.constant 1.000000e+00 : f32
    %160 = vector.broadcast %cst_68 : f32 to vector<16x64xf32>
    %161 = arith.addf %160, %159 : vector<16x64xf32>
    %162 = arith.mulf %123, %161 : vector<16x64xf32>
    %163 = arith.truncf %162 : vector<16x64xf32> to vector<16x64xbf16>
    %c0_69 = arith.constant 0 : index
    %c0_70 = arith.constant 0 : index
    %c0_71 = arith.constant 0 : index
    %164 = vector.load %arg12[%c0_69, %c0_70, %c0_71] : memref<2x64x32xbf16, #tpu.memory_space<vmem>>, vector<1x64x32xbf16>
    %165 = vector.shape_cast %164 : vector<1x64x32xbf16> to vector<64x32xbf16>
    %cst_72 = arith.constant dense<0.000000e+00> : vector<16x32xf32>
    %166 = tpu.matmul %163, %165, %cst_72 {dimension_numbers = #tpu.dot_dimension_numbers<[1], [0], [0], [1], [0, 0, 1, 1], [], []>} : vector<16x64xbf16>, vector<64x32xbf16>, vector<16x32xf32> -> vector<16x32xf32>
    %c0_73 = arith.constant 0 : index
    %c0_74 = arith.constant 0 : index
    %c0_75 = arith.constant 0 : index
    %167 = vector.load %arg13[%c0_73, %c0_74, %c0_75] : memref<2x1x32xf32, #tpu.memory_space<vmem>>, vector<1x1x32xf32>
    %168 = vector.shape_cast %167 : vector<1x1x32xf32> to vector<1x32xf32>
    %169 = vector.broadcast %168 : vector<1x32xf32> to vector<16x32xf32>
    %170 = arith.addf %166, %169 : vector<16x32xf32>
    %171 = arith.addf %113, %170 : vector<16x32xf32>
    %c0_76 = arith.constant 0 : index
    %c0_77 = arith.constant 0 : index
    %c0_78 = arith.constant 0 : index
    %172 = vector.load %arg14[%c0_76, %c0_77, %c0_78] : memref<2x1x32xf32, #tpu.memory_space<vmem>>, vector<1x1x32xf32>
    %173 = vector.shape_cast %172 : vector<1x1x32xf32> to vector<1x32xf32>
    %c0_79 = arith.constant 0 : index
    %c0_80 = arith.constant 0 : index
    %c0_81 = arith.constant 0 : index
    %174 = vector.load %arg15[%c0_79, %c0_80, %c0_81] : memref<2x1x32xf32, #tpu.memory_space<vmem>>, vector<1x1x32xf32>
    %175 = vector.shape_cast %174 : vector<1x1x32xf32> to vector<1x32xf32>
    %cst_82 = arith.constant dense<0.000000e+00> : vector<16xf32>
    %176 = vector.multi_reduction <add>, %171, %cst_82 [1] : vector<16x32xf32> to vector<16xf32>
    %177 = vector.shape_cast %176 : vector<16xf32> to vector<16x1xf32>
    %cst_83 = arith.constant 3.200000e+01 : f32
    %178 = vector.broadcast %cst_83 : f32 to vector<16x1xf32>
    %179 = arith.divf %177, %178 : vector<16x1xf32>
    %180 = vector.broadcast %179 : vector<16x1xf32> to vector<16x32xf32>
    %181 = arith.subf %171, %180 : vector<16x32xf32>
    %182 = arith.mulf %181, %181 : vector<16x32xf32>
    %cst_84 = arith.constant dense<0.000000e+00> : vector<16xf32>
    %183 = vector.multi_reduction <add>, %182, %cst_84 [1] : vector<16x32xf32> to vector<16xf32>
    %184 = vector.shape_cast %183 : vector<16xf32> to vector<16x1xf32>
    %cst_85 = arith.constant 3.200000e+01 : f32
    %185 = vector.broadcast %cst_85 : f32 to vector<16x1xf32>
    %186 = arith.divf %184, %185 : vector<16x1xf32>
    %187 = vector.broadcast %179 : vector<16x1xf32> to vector<16x32xf32>
    %188 = arith.subf %171, %187 : vector<16x32xf32>
    %cst_86 = arith.constant 9.99999996E-13 : f32
    %189 = vector.broadcast %cst_86 : f32 to vector<16x1xf32>
    %190 = arith.addf %186, %189 : vector<16x1xf32>
    %191 = math.rsqrt %190 : vector<16x1xf32>
    %192 = vector.broadcast %191 : vector<16x1xf32> to vector<16x32xf32>
    %193 = arith.mulf %188, %192 : vector<16x32xf32>
    %194 = vector.broadcast %173 : vector<1x32xf32> to vector<16x32xf32>
    %195 = arith.mulf %193, %194 : vector<16x32xf32>
    %196 = vector.broadcast %175 : vector<1x32xf32> to vector<16x32xf32>
    %197 = arith.addf %195, %196 : vector<16x32xf32>
    %198 = arith.truncf %197 : vector<16x32xf32> to vector<16x32xbf16>
    %c1 = arith.constant 1 : index
    %c0_87 = arith.constant 0 : index
    %c0_88 = arith.constant 0 : index
    %199 = vector.load %arg4[%c1, %c0_87, %c0_88] : memref<2x32x96xbf16, #tpu.memory_space<vmem>>, vector<1x32x96xbf16>
    %200 = vector.shape_cast %199 : vector<1x32x96xbf16> to vector<32x96xbf16>
    %cst_89 = arith.constant dense<0.000000e+00> : vector<16x96xf32>
    %201 = tpu.matmul %198, %200, %cst_89 {dimension_numbers = #tpu.dot_dimension_numbers<[1], [0], [0], [1], [0, 0, 1, 1], [], []>} : vector<16x32xbf16>, vector<32x96xbf16>, vector<16x96xf32> -> vector<16x96xf32>
    %c1_90 = arith.constant 1 : index
    %c0_91 = arith.constant 0 : index
    %c0_92 = arith.constant 0 : index
    %202 = vector.load %arg5[%c1_90, %c0_91, %c0_92] : memref<2x1x96xf32, #tpu.memory_space<vmem>>, vector<1x1x96xf32>
    %203 = vector.shape_cast %202 : vector<1x1x96xf32> to vector<1x96xf32>
    %204 = vector.broadcast %203 : vector<1x96xf32> to vector<16x96xf32>
    %205 = arith.addf %201, %204 : vector<16x96xf32>
    %206 = vector.extract_strided_slice %205 {offsets = [0, 32], sizes = [16, 32], strides = [1, 1]} : vector<16x96xf32> to vector<16x32xf32>
    %207 = tpu.transpose %206, [1, 0] : vector<16x32xf32> -> vector<32x16xf32>
    %208 = vector.extract_strided_slice %205 {offsets = [0, 0], sizes = [16, 16], strides = [1, 1]} : vector<16x96xf32> to vector<16x16xf32>
    %209 = arith.truncf %208 : vector<16x16xf32> to vector<16x16xbf16>
    %210 = vector.extract_strided_slice %207 {offsets = [0, 0], sizes = [16, 16], strides = [1, 1]} : vector<32x16xf32> to vector<16x16xf32>
    %211 = arith.truncf %210 : vector<16x16xf32> to vector<16x16xbf16>
    %212 = vector.extract_strided_slice %205 {offsets = [0, 64], sizes = [16, 16], strides = [1, 1]} : vector<16x96xf32> to vector<16x16xf32>
    %213 = arith.truncf %212 : vector<16x16xf32> to vector<16x16xbf16>
    %cst_93 = arith.constant dense<0.000000e+00> : vector<16x16xf32>
    %214 = tpu.matmul %209, %211, %cst_93 {dimension_numbers = #tpu.dot_dimension_numbers<[1], [0], [0], [1], [0, 0, 1, 1], [], []>} : vector<16x16xbf16>, vector<16x16xbf16>, vector<16x16xf32> -> vector<16x16xf32>
    %215 = arith.addf %214, %0 : vector<16x16xf32>
    %cst_94 = arith.constant dense<0xFF800000> : vector<16xf32>
    %216 = vector.multi_reduction <maximumf>, %215, %cst_94 [1] : vector<16x16xf32> to vector<16xf32>
    %217 = vector.shape_cast %216 : vector<16xf32> to vector<16x1xf32>
    %218 = vector.broadcast %217 : vector<16x1xf32> to vector<16x16xf32>
    %219 = arith.subf %215, %218 : vector<16x16xf32>
    %220 = math.exp %219 : vector<16x16xf32>
    %cst_95 = arith.constant dense<0.000000e+00> : vector<16xf32>
    %221 = vector.multi_reduction <add>, %220, %cst_95 [1] : vector<16x16xf32> to vector<16xf32>
    %222 = vector.shape_cast %221 : vector<16xf32> to vector<16x1xf32>
    %cst_96 = arith.constant 1.000000e+00 : f32
    %223 = vector.broadcast %cst_96 : f32 to vector<16x1xf32>
    %224 = arith.divf %223, %222 : vector<16x1xf32>
    %225 = vector.broadcast %224 : vector<16x1xf32> to vector<16x16xf32>
    %226 = arith.mulf %220, %225 : vector<16x16xf32>
    %227 = arith.truncf %226 : vector<16x16xf32> to vector<16x16xbf16>
    %cst_97 = arith.constant dense<0.000000e+00> : vector<16x16xf32>
    %228 = tpu.matmul %227, %213, %cst_97 {dimension_numbers = #tpu.dot_dimension_numbers<[1], [0], [0], [1], [0, 0, 1, 1], [], []>} : vector<16x16xbf16>, vector<16x16xbf16>, vector<16x16xf32> -> vector<16x16xf32>
    %229 = vector.extract_strided_slice %205 {offsets = [0, 16], sizes = [16, 16], strides = [1, 1]} : vector<16x96xf32> to vector<16x16xf32>
    %230 = arith.truncf %229 : vector<16x16xf32> to vector<16x16xbf16>
    %231 = vector.extract_strided_slice %207 {offsets = [16, 0], sizes = [16, 16], strides = [1, 1]} : vector<32x16xf32> to vector<16x16xf32>
    %232 = arith.truncf %231 : vector<16x16xf32> to vector<16x16xbf16>
    %233 = vector.extract_strided_slice %205 {offsets = [0, 80], sizes = [16, 16], strides = [1, 1]} : vector<16x96xf32> to vector<16x16xf32>
    %234 = arith.truncf %233 : vector<16x16xf32> to vector<16x16xbf16>
    %cst_98 = arith.constant dense<0.000000e+00> : vector<16x16xf32>
    %235 = tpu.matmul %230, %232, %cst_98 {dimension_numbers = #tpu.dot_dimension_numbers<[1], [0], [0], [1], [0, 0, 1, 1], [], []>} : vector<16x16xbf16>, vector<16x16xbf16>, vector<16x16xf32> -> vector<16x16xf32>
    %236 = arith.addf %235, %0 : vector<16x16xf32>
    %cst_99 = arith.constant dense<0xFF800000> : vector<16xf32>
    %237 = vector.multi_reduction <maximumf>, %236, %cst_99 [1] : vector<16x16xf32> to vector<16xf32>
    %238 = vector.shape_cast %237 : vector<16xf32> to vector<16x1xf32>
    %239 = vector.broadcast %238 : vector<16x1xf32> to vector<16x16xf32>
    %240 = arith.subf %236, %239 : vector<16x16xf32>
    %241 = math.exp %240 : vector<16x16xf32>
    %cst_100 = arith.constant dense<0.000000e+00> : vector<16xf32>
    %242 = vector.multi_reduction <add>, %241, %cst_100 [1] : vector<16x16xf32> to vector<16xf32>
    %243 = vector.shape_cast %242 : vector<16xf32> to vector<16x1xf32>
    %cst_101 = arith.constant 1.000000e+00 : f32
    %244 = vector.broadcast %cst_101 : f32 to vector<16x1xf32>
    %245 = arith.divf %244, %243 : vector<16x1xf32>
    %246 = vector.broadcast %245 : vector<16x1xf32> to vector<16x16xf32>
    %247 = arith.mulf %241, %246 : vector<16x16xf32>
    %248 = arith.truncf %247 : vector<16x16xf32> to vector<16x16xbf16>
    %cst_102 = arith.constant dense<0.000000e+00> : vector<16x16xf32>
    %249 = tpu.matmul %248, %234, %cst_102 {dimension_numbers = #tpu.dot_dimension_numbers<[1], [0], [0], [1], [0, 0, 1, 1], [], []>} : vector<16x16xbf16>, vector<16x16xbf16>, vector<16x16xf32> -> vector<16x16xf32>
    %250 = tpu.concatenate %228, %249 in 1 : vector<16x16xf32>, vector<16x16xf32> -> vector<16x32xf32>
    %251 = arith.truncf %250 : vector<16x32xf32> to vector<16x32xbf16>
    %c1_103 = arith.constant 1 : index
    %c0_104 = arith.constant 0 : index
    %c0_105 = arith.constant 0 : index
    %252 = vector.load %arg6[%c1_103, %c0_104, %c0_105] : memref<2x32x32xbf16, #tpu.memory_space<vmem>>, vector<1x32x32xbf16>
    %253 = vector.shape_cast %252 : vector<1x32x32xbf16> to vector<32x32xbf16>
    %cst_106 = arith.constant dense<0.000000e+00> : vector<16x32xf32>
    %254 = tpu.matmul %251, %253, %cst_106 {dimension_numbers = #tpu.dot_dimension_numbers<[1], [0], [0], [1], [0, 0, 1, 1], [], []>} : vector<16x32xbf16>, vector<32x32xbf16>, vector<16x32xf32> -> vector<16x32xf32>
    %c1_107 = arith.constant 1 : index
    %c0_108 = arith.constant 0 : index
    %c0_109 = arith.constant 0 : index
    %255 = vector.load %arg7[%c1_107, %c0_108, %c0_109] : memref<2x1x32xf32, #tpu.memory_space<vmem>>, vector<1x1x32xf32>
    %256 = vector.shape_cast %255 : vector<1x1x32xf32> to vector<1x32xf32>
    %257 = vector.broadcast %256 : vector<1x32xf32> to vector<16x32xf32>
    %258 = arith.addf %254, %257 : vector<16x32xf32>
    %259 = arith.addf %197, %258 : vector<16x32xf32>
    %c1_110 = arith.constant 1 : index
    %c0_111 = arith.constant 0 : index
    %c0_112 = arith.constant 0 : index
    %260 = vector.load %arg8[%c1_110, %c0_111, %c0_112] : memref<2x1x32xf32, #tpu.memory_space<vmem>>, vector<1x1x32xf32>
    %261 = vector.shape_cast %260 : vector<1x1x32xf32> to vector<1x32xf32>
    %c1_113 = arith.constant 1 : index
    %c0_114 = arith.constant 0 : index
    %c0_115 = arith.constant 0 : index
    %262 = vector.load %arg9[%c1_113, %c0_114, %c0_115] : memref<2x1x32xf32, #tpu.memory_space<vmem>>, vector<1x1x32xf32>
    %263 = vector.shape_cast %262 : vector<1x1x32xf32> to vector<1x32xf32>
    %cst_116 = arith.constant dense<0.000000e+00> : vector<16xf32>
    %264 = vector.multi_reduction <add>, %259, %cst_116 [1] : vector<16x32xf32> to vector<16xf32>
    %265 = vector.shape_cast %264 : vector<16xf32> to vector<16x1xf32>
    %cst_117 = arith.constant 3.200000e+01 : f32
    %266 = vector.broadcast %cst_117 : f32 to vector<16x1xf32>
    %267 = arith.divf %265, %266 : vector<16x1xf32>
    %268 = vector.broadcast %267 : vector<16x1xf32> to vector<16x32xf32>
    %269 = arith.subf %259, %268 : vector<16x32xf32>
    %270 = arith.mulf %269, %269 : vector<16x32xf32>
    %cst_118 = arith.constant dense<0.000000e+00> : vector<16xf32>
    %271 = vector.multi_reduction <add>, %270, %cst_118 [1] : vector<16x32xf32> to vector<16xf32>
    %272 = vector.shape_cast %271 : vector<16xf32> to vector<16x1xf32>
    %cst_119 = arith.constant 3.200000e+01 : f32
    %273 = vector.broadcast %cst_119 : f32 to vector<16x1xf32>
    %274 = arith.divf %272, %273 : vector<16x1xf32>
    %275 = vector.broadcast %267 : vector<16x1xf32> to vector<16x32xf32>
    %276 = arith.subf %259, %275 : vector<16x32xf32>
    %cst_120 = arith.constant 9.99999996E-13 : f32
    %277 = vector.broadcast %cst_120 : f32 to vector<16x1xf32>
    %278 = arith.addf %274, %277 : vector<16x1xf32>
    %279 = math.rsqrt %278 : vector<16x1xf32>
    %280 = vector.broadcast %279 : vector<16x1xf32> to vector<16x32xf32>
    %281 = arith.mulf %276, %280 : vector<16x32xf32>
    %282 = vector.broadcast %261 : vector<1x32xf32> to vector<16x32xf32>
    %283 = arith.mulf %281, %282 : vector<16x32xf32>
    %284 = vector.broadcast %263 : vector<1x32xf32> to vector<16x32xf32>
    %285 = arith.addf %283, %284 : vector<16x32xf32>
    %286 = arith.truncf %285 : vector<16x32xf32> to vector<16x32xbf16>
    %c1_121 = arith.constant 1 : index
    %c0_122 = arith.constant 0 : index
    %c0_123 = arith.constant 0 : index
    %287 = vector.load %arg10[%c1_121, %c0_122, %c0_123] : memref<2x32x64xbf16, #tpu.memory_space<vmem>>, vector<1x32x64xbf16>
    %288 = vector.shape_cast %287 : vector<1x32x64xbf16> to vector<32x64xbf16>
    %cst_124 = arith.constant dense<0.000000e+00> : vector<16x64xf32>
    %289 = tpu.matmul %286, %288, %cst_124 {dimension_numbers = #tpu.dot_dimension_numbers<[1], [0], [0], [1], [0, 0, 1, 1], [], []>} : vector<16x32xbf16>, vector<32x64xbf16>, vector<16x64xf32> -> vector<16x64xf32>
    %c1_125 = arith.constant 1 : index
    %c0_126 = arith.constant 0 : index
    %c0_127 = arith.constant 0 : index
    %290 = vector.load %arg11[%c1_125, %c0_126, %c0_127] : memref<2x1x64xf32, #tpu.memory_space<vmem>>, vector<1x1x64xf32>
    %291 = vector.shape_cast %290 : vector<1x1x64xf32> to vector<1x64xf32>
    %292 = vector.broadcast %291 : vector<1x64xf32> to vector<16x64xf32>
    %293 = arith.addf %289, %292 : vector<16x64xf32>
    %cst_128 = arith.constant 5.000000e-01 : f32
    %294 = vector.broadcast %cst_128 : f32 to vector<16x64xf32>
    %295 = arith.mulf %294, %293 : vector<16x64xf32>
    %cst_129 = arith.constant 0.707106769 : f32
    %296 = vector.broadcast %cst_129 : f32 to vector<16x64xf32>
    %297 = arith.mulf %293, %296 : vector<16x64xf32>
    %cst_130 = arith.constant 0.000000e+00 : f32
    %298 = vector.broadcast %cst_130 : f32 to vector<16x64xf32>
    %299 = arith.cmpf oge, %297, %298 : vector<16x64xf32>
    %cst_131 = arith.constant 1.000000e+00 : f32
    %cst_132 = arith.constant -1.000000e+00 : f32
    %300 = vector.broadcast %cst_131 : f32 to vector<16x64xf32>
    %301 = vector.broadcast %cst_132 : f32 to vector<16x64xf32>
    %302 = arith.select %299, %300, %301 : vector<16x64xi1>, vector<16x64xf32>
    %303 = math.absf %297 : vector<16x64xf32>
    %cst_133 = arith.constant 0.327591091 : f32
    %304 = vector.broadcast %cst_133 : f32 to vector<16x64xf32>
    %305 = arith.mulf %304, %303 : vector<16x64xf32>
    %cst_134 = arith.constant 1.000000e+00 : f32
    %306 = vector.broadcast %cst_134 : f32 to vector<16x64xf32>
    %307 = arith.addf %306, %305 : vector<16x64xf32>
    %cst_135 = arith.constant 1.000000e+00 : f32
    %308 = vector.broadcast %cst_135 : f32 to vector<16x64xf32>
    %309 = arith.divf %308, %307 : vector<16x64xf32>
    %cst_136 = arith.constant 1.06140542 : f32
    %310 = vector.broadcast %cst_136 : f32 to vector<16x64xf32>
    %311 = arith.mulf %310, %309 : vector<16x64xf32>
    %cst_137 = arith.constant -1.45315206 : f32
    %312 = vector.broadcast %cst_137 : f32 to vector<16x64xf32>
    %313 = arith.addf %311, %312 : vector<16x64xf32>
    %314 = arith.mulf %313, %309 : vector<16x64xf32>
    %cst_138 = arith.constant 1.42141378 : f32
    %315 = vector.broadcast %cst_138 : f32 to vector<16x64xf32>
    %316 = arith.addf %314, %315 : vector<16x64xf32>
    %317 = arith.mulf %316, %309 : vector<16x64xf32>
    %cst_139 = arith.constant -0.284496725 : f32
    %318 = vector.broadcast %cst_139 : f32 to vector<16x64xf32>
    %319 = arith.addf %317, %318 : vector<16x64xf32>
    %320 = arith.mulf %319, %309 : vector<16x64xf32>
    %cst_140 = arith.constant 0.254829586 : f32
    %321 = vector.broadcast %cst_140 : f32 to vector<16x64xf32>
    %322 = arith.addf %320, %321 : vector<16x64xf32>
    %323 = arith.mulf %322, %309 : vector<16x64xf32>
    %cst_141 = arith.constant 0.000000e+00 : f32
    %324 = vector.broadcast %cst_141 : f32 to vector<16x64xf32>
    %325 = arith.subf %324, %303 : vector<16x64xf32>
    %326 = arith.mulf %325, %303 : vector<16x64xf32>
    %327 = math.exp %326 : vector<16x64xf32>
    %328 = arith.mulf %323, %327 : vector<16x64xf32>
    %cst_142 = arith.constant 1.000000e+00 : f32
    %329 = vector.broadcast %cst_142 : f32 to vector<16x64xf32>
    %330 = arith.subf %329, %328 : vector<16x64xf32>
    %331 = arith.mulf %302, %330 : vector<16x64xf32>
    %cst_143 = arith.constant 1.000000e+00 : f32
    %332 = vector.broadcast %cst_143 : f32 to vector<16x64xf32>
    %333 = arith.addf %332, %331 : vector<16x64xf32>
    %334 = arith.mulf %295, %333 : vector<16x64xf32>
    %335 = arith.truncf %334 : vector<16x64xf32> to vector<16x64xbf16>
    %c1_144 = arith.constant 1 : index
    %c0_145 = arith.constant 0 : index
    %c0_146 = arith.constant 0 : index
    %336 = vector.load %arg12[%c1_144, %c0_145, %c0_146] : memref<2x64x32xbf16, #tpu.memory_space<vmem>>, vector<1x64x32xbf16>
    %337 = vector.shape_cast %336 : vector<1x64x32xbf16> to vector<64x32xbf16>
    %cst_147 = arith.constant dense<0.000000e+00> : vector<16x32xf32>
    %338 = tpu.matmul %335, %337, %cst_147 {dimension_numbers = #tpu.dot_dimension_numbers<[1], [0], [0], [1], [0, 0, 1, 1], [], []>} : vector<16x64xbf16>, vector<64x32xbf16>, vector<16x32xf32> -> vector<16x32xf32>
    %c1_148 = arith.constant 1 : index
    %c0_149 = arith.constant 0 : index
    %c0_150 = arith.constant 0 : index
    %339 = vector.load %arg13[%c1_148, %c0_149, %c0_150] : memref<2x1x32xf32, #tpu.memory_space<vmem>>, vector<1x1x32xf32>
    %340 = vector.shape_cast %339 : vector<1x1x32xf32> to vector<1x32xf32>
    %341 = vector.broadcast %340 : vector<1x32xf32> to vector<16x32xf32>
    %342 = arith.addf %338, %341 : vector<16x32xf32>
    %343 = arith.addf %285, %342 : vector<16x32xf32>
    %c1_151 = arith.constant 1 : index
    %c0_152 = arith.constant 0 : index
    %c0_153 = arith.constant 0 : index
    %344 = vector.load %arg14[%c1_151, %c0_152, %c0_153] : memref<2x1x32xf32, #tpu.memory_space<vmem>>, vector<1x1x32xf32>
    %345 = vector.shape_cast %344 : vector<1x1x32xf32> to vector<1x32xf32>
    %c1_154 = arith.constant 1 : index
    %c0_155 = arith.constant 0 : index
    %c0_156 = arith.constant 0 : index
    %346 = vector.load %arg15[%c1_154, %c0_155, %c0_156] : memref<2x1x32xf32, #tpu.memory_space<vmem>>, vector<1x1x32xf32>
    %347 = vector.shape_cast %346 : vector<1x1x32xf32> to vector<1x32xf32>
    %cst_157 = arith.constant dense<0.000000e+00> : vector<16xf32>
    %348 = vector.multi_reduction <add>, %343, %cst_157 [1] : vector<16x32xf32> to vector<16xf32>
    %349 = vector.shape_cast %348 : vector<16xf32> to vector<16x1xf32>
    %cst_158 = arith.constant 3.200000e+01 : f32
    %350 = vector.broadcast %cst_158 : f32 to vector<16x1xf32>
    %351 = arith.divf %349, %350 : vector<16x1xf32>
    %352 = vector.broadcast %351 : vector<16x1xf32> to vector<16x32xf32>
    %353 = arith.subf %343, %352 : vector<16x32xf32>
    %354 = arith.mulf %353, %353 : vector<16x32xf32>
    %cst_159 = arith.constant dense<0.000000e+00> : vector<16xf32>
    %355 = vector.multi_reduction <add>, %354, %cst_159 [1] : vector<16x32xf32> to vector<16xf32>
    %356 = vector.shape_cast %355 : vector<16xf32> to vector<16x1xf32>
    %cst_160 = arith.constant 3.200000e+01 : f32
    %357 = vector.broadcast %cst_160 : f32 to vector<16x1xf32>
    %358 = arith.divf %356, %357 : vector<16x1xf32>
    %359 = vector.broadcast %351 : vector<16x1xf32> to vector<16x32xf32>
    %360 = arith.subf %343, %359 : vector<16x32xf32>
    %cst_161 = arith.constant 9.99999996E-13 : f32
    %361 = vector.broadcast %cst_161 : f32 to vector<16x1xf32>
    %362 = arith.addf %358, %361 : vector<16x1xf32>
    %363 = math.rsqrt %362 : vector<16x1xf32>
    %364 = vector.broadcast %363 : vector<16x1xf32> to vector<16x32xf32>
    %365 = arith.mulf %360, %364 : vector<16x32xf32>
    %366 = vector.broadcast %345 : vector<1x32xf32> to vector<16x32xf32>
    %367 = arith.mulf %365, %366 : vector<16x32xf32>
    %368 = vector.broadcast %347 : vector<1x32xf32> to vector<16x32xf32>
    %369 = arith.addf %367, %368 : vector<16x32xf32>
    %370 = vector.extract_strided_slice %369 {offsets = [0, 0], sizes = [1, 32], strides = [1, 1]} : vector<16x32xf32> to vector<1x32xf32>
    %371 = vector.extract_strided_slice %369 {offsets = [8, 0], sizes = [1, 32], strides = [1, 1]} : vector<16x32xf32> to vector<1x32xf32>
    %372 = tpu.concatenate %370, %371 in 0 : vector<1x32xf32>, vector<1x32xf32> -> vector<2x32xf32>
    %373 = arith.truncf %372 : vector<2x32xf32> to vector<2x32xbf16>
    %c0_162 = arith.constant 0 : index
    %c0_163 = arith.constant 0 : index
    %374 = vector.load %arg16[%c0_162, %c0_163] : memref<32x32xbf16, #tpu.memory_space<vmem>>, vector<32x32xbf16>
    %cst_164 = arith.constant dense<0.000000e+00> : vector<2x32xf32>
    %375 = tpu.matmul %373, %374, %cst_164 {dimension_numbers = #tpu.dot_dimension_numbers<[1], [0], [0], [1], [0, 0, 1, 1], [], []>} : vector<2x32xbf16>, vector<32x32xbf16>, vector<2x32xf32> -> vector<2x32xf32>
    %c0_165 = arith.constant 0 : index
    %c0_166 = arith.constant 0 : index
    %376 = vector.load %arg17[%c0_165, %c0_166] : memref<1x32xf32, #tpu.memory_space<vmem>>, vector<1x32xf32>
    %377 = vector.broadcast %376 : vector<1x32xf32> to vector<2x32xf32>
    %378 = arith.addf %375, %377 : vector<2x32xf32>
    %379 = math.tanh %378 : vector<2x32xf32>
    %380 = arith.truncf %379 : vector<2x32xf32> to vector<2x32xbf16>
    %c0_167 = arith.constant 0 : index
    %c0_168 = arith.constant 0 : index
    %381 = vector.load %arg18[%c0_167, %c0_168] : memref<32x2xbf16, #tpu.memory_space<vmem>>, vector<32x2xbf16>
    %cst_169 = arith.constant dense<0.000000e+00> : vector<2x2xf32>
    %382 = tpu.matmul %380, %381, %cst_169 {dimension_numbers = #tpu.dot_dimension_numbers<[1], [0], [0], [1], [0, 0, 1, 1], [], []>} : vector<2x32xbf16>, vector<32x2xbf16>, vector<2x2xf32> -> vector<2x2xf32>
    %c0_170 = arith.constant 0 : index
    %c0_171 = arith.constant 0 : index
    %383 = vector.load %arg19[%c0_170, %c0_171] : memref<1x2xf32, #tpu.memory_space<vmem>>, vector<1x2xf32>
    %384 = vector.broadcast %383 : vector<1x2xf32> to vector<2x2xf32>
    %385 = arith.addf %382, %384 : vector<2x2xf32>
    %c0_172 = arith.constant 0 : index
    %c0_173 = arith.constant 0 : index
    %386 = vector.load %arg20[%c0_172, %c0_173] : memref<2x2xf32, #tpu.memory_space<vmem>>, vector<2x2xf32>
    tpu.vector_store %arg20[%c0_172, %c0_173], %385 {strides = array<i32>} : memref<2x2xf32, #tpu.memory_space<vmem>>, vector<2x2xf32>,
    return
  }
}

</mosaic_0001>

<llo_original>
// kernel: mybert_forward.1
$region0: #{mybert_forward.1}
  #allocation0 [shape = 'u32[]', space=smem, size = 0x4, offset = 0x4, fixed_abs, tag = 'smem constant byte address 0x4 - core index']
  #allocation1 [shape = 'u32[72,128]{1,0:T(1,128)}', space=vmem, size = 0x9000, scoped, tag = 'internal scratch']
  %s0 = inlined_call_operand.vmem [shape: f32[16,32], index: 0, kind: input, shape index: {}]
  %s1 = inlined_call_operand.vmem [shape: f32[16,16], index: 1, kind: input, shape index: {}]
  %s2 = inlined_call_operand.vmem [shape: f32[1,32], index: 2, kind: input, shape index: {}]
  %s3 = inlined_call_operand.vmem [shape: f32[1,32], index: 3, kind: input, shape index: {}]
  %s4 = inlined_call_operand.vmem [shape: bf16[2,32,96], index: 4, kind: input, shape index: {}]
  %s5 = inlined_call_operand.vmem [shape: f32[2,1,96], index: 5, kind: input, shape index: {}]
  %s6 = inlined_call_operand.vmem [shape: bf16[2,32,32], index: 6, kind: input, shape index: {}]
  %s7 = inlined_call_operand.vmem [shape: f32[2,1,32], index: 7, kind: input, shape index: {}]
  %s8 = inlined_call_operand.vmem [shape: f32[2,1,32], index: 8, kind: input, shape index: {}]
  %s9 = inlined_call_operand.vmem [shape: f32[2,1,32], index: 9, kind: input, shape index: {}]
  %s10 = inlined_call_operand.vmem [shape: bf16[2,32,64], index: 10, kind: input, shape index: {}]
  %s11 = inlined_call_operand.vmem [shape: f32[2,1,64], index: 11, kind: input, shape index: {}]
  %s12 = inlined_call_operand.vmem [shape: bf16[2,64,32], index: 12, kind: input, shape index: {}]
  %s13 = inlined_call_operand.vmem [shape: f32[2,1,32], index: 13, kind: input, shape index: {}]
  %s14 = inlined_call_operand.vmem [shape: f32[2,1,32], index: 14, kind: input, shape index: {}]
  %s15 = inlined_call_operand.vmem [shape: f32[2,1,32], index: 15, kind: input, shape index: {}]
  %s16 = inlined_call_operand.vmem [shape: bf16[32,32], index: 16, kind: input, shape index: {}]
  %s17 = inlined_call_operand.vmem [shape: f32[1,32], index: 17, kind: input, shape index: {}]
  %s18 = inlined_call_operand.vmem [shape: bf16[32,2], index: 18, kind: input, shape index: {}]
  %s19 = inlined_call_operand.vmem [shape: f32[1,2], index: 19, kind: input, shape index: {}]
  %s20 = inlined_call_operand.hbm [shape: f32[2,2], index: 20, kind: output, shape index: {}]
  %s21 = sld [smem:[#allocation0]]
  $region90: #{mybert_forward.1} parent=0
    _
  %s23 = ssub.s32 1, %s21
  %s24 = scalar_select 0, %s23, %s21
  $region1: #{mybert_forward.1} parent=0
    #allocation2 [shape = 'u8[1024]{0}', space=vmem, size = 0x400, scoped, tag = 'output window, operand 0, single buffered']
    #allocation3 [shape = 's32[1]{0}', space=sflag, size = 0x4, scoped, tag = 'scoped memory for mybert_forward.1']
    %25 = vsyncpa [#allocation3], 0
    // Predicated region
    $region2: #{mybert_forward.1} parent=1 // pred_check
      _
    $region3: #{mybert_forward.1} parent=1 // pred_check_branch
      %27 = sbr.rel (0) target = $region5
    $region4: #{mybert_forward.1} parent=1 // pred_region
      _
    $region5: #{mybert_forward.1} parent=1 // pred_fallthru
      _
    // Predicated region
    $region6: #{mybert_forward.1} parent=1 // pred_check
      _
    $region7: #{mybert_forward.1} parent=1 // pred_check_branch
      %29 = sbr.rel (0) target = $region9
    $region8: #{mybert_forward.1} parent=1 // pred_region
      _
    $region9: #{mybert_forward.1} parent=1 // pred_fallthru
      _
    // Predicated region
    $region10: #{mybert_forward.1} parent=1 // pred_check
      _
    $region11: #{mybert_forward.1} parent=1 // pred_check_branch
      %31 = sbr.rel (0) target = $region13
    $region12: #{mybert_forward.1} parent=1 // pred_region
      _
    $region13: #{mybert_forward.1} parent=1 // pred_fallthru
      _
    // Predicated region
    $region14: #{mybert_forward.1} parent=1 // pred_check
      _
    $region15: #{mybert_forward.1} parent=1 // pred_check_branch
      %33 = sbr.rel (0) target = $region17
    $region16: #{mybert_forward.1} parent=1 // pred_region
      _
    $region17: #{mybert_forward.1} parent=1 // pred_fallthru
      _
    // Predicated region
    $region18: #{mybert_forward.1} parent=1 // pred_check
      _
    $region19: #{mybert_forward.1} parent=1 // pred_check_branch
      %35 = sbr.rel (0) target = $region21
    $region20: #{mybert_forward.1} parent=1 // pred_region
      _
    $region21: #{mybert_forward.1} parent=1 // pred_fallthru
      _
    // Predicated region
    $region22: #{mybert_forward.1} parent=1 // pred_check
      _
    $region23: #{mybert_forward.1} parent=1 // pred_check_branch
      %37 = sbr.rel (0) target = $region25
    $region24: #{mybert_forward.1} parent=1 // pred_region
      _
    $region25: #{mybert_forward.1} parent=1 // pred_fallthru
      _
    // Predicated region
    $region26: #{mybert_forward.1} parent=1 // pred_check
      _
    $region27: #{mybert_forward.1} parent=1 // pred_check_branch
      %39 = sbr.rel (0) target = $region29
    $region28: #{mybert_forward.1} parent=1 // pred_region
      _
    $region29: #{mybert_forward.1} parent=1 // pred_fallthru
      _
    // Predicated region
    $region30: #{mybert_forward.1} parent=1 // pred_check
      _
    $region31: #{mybert_forward.1} parent=1 // pred_check_branch
      %41 = sbr.rel (0) target = $region33
    $region32: #{mybert_forward.1} parent=1 // pred_region
      _
    $region33: #{mybert_forward.1} parent=1 // pred_fallthru
      _
    // Predicated region
    $region34: #{mybert_forward.1} parent=1 // pred_check
      _
    $region35: #{mybert_forward.1} parent=1 // pred_check_branch
      %43 = sbr.rel (0) target = $region37
    $region36: #{mybert_forward.1} parent=1 // pred_region
      _
    $region37: #{mybert_forward.1} parent=1 // pred_fallthru
      _
    // Predicated region
    $region38: #{mybert_forward.1} parent=1 // pred_check
      _
    $region39: #{mybert_forward.1} parent=1 // pred_check_branch
      %45 = sbr.rel (0) target = $region41
    $region40: #{mybert_forward.1} parent=1 // pred_region
      _
    $region41: #{mybert_forward.1} parent=1 // pred_fallthru
      _
    // Predicated region
    $region42: #{mybert_forward.1} parent=1 // pred_check
      _
    $region43: #{mybert_forward.1} parent=1 // pred_check_branch
      %47 = sbr.rel (0) target = $region45
    $region44: #{mybert_forward.1} parent=1 // pred_region
      _
    $region45: #{mybert_forward.1} parent=1 // pred_fallthru
      _
    // Predicated region
    $region46: #{mybert_forward.1} parent=1 // pred_check
      _
    $region47: #{mybert_forward.1} parent=1 // pred_check_branch
      %49 = sbr.rel (0) target = $region49
    $region48: #{mybert_forward.1} parent=1 // pred_region
      _
    $region49: #{mybert_forward.1} parent=1 // pred_fallthru
      _
    // Predicated region
    $region50: #{mybert_forward.1} parent=1 // pred_check
      _
    $region51: #{mybert_forward.1} parent=1 // pred_check_branch
      %51 = sbr.rel (0) target = $region53
    $region52: #{mybert_forward.1} parent=1 // pred_region
      _
    $region53: #{mybert_forward.1} parent=1 // pred_fallthru
      _
    // Predicated region
    $region54: #{mybert_forward.1} parent=1 // pred_check
      _
    $region55: #{mybert_forward.1} parent=1 // pred_check_branch
      %53 = sbr.rel (0) target = $region57
    $region56: #{mybert_forward.1} parent=1 // pred_region
      _
    $region57: #{mybert_forward.1} parent=1 // pred_fallthru
      _
    // Predicated region
    $region58: #{mybert_forward.1} parent=1 // pred_check
      _
    $region59: #{mybert_forward.1} parent=1 // pred_check_branch
      %55 = sbr.rel (0) target = $region61
    $region60: #{mybert_forward.1} parent=1 // pred_region
      _
    $region61: #{mybert_forward.1} parent=1 // pred_fallthru
      _
    // Predicated region
    $region62: #{mybert_forward.1} parent=1 // pred_check
      _
    $region63: #{mybert_forward.1} parent=1 // pred_check_branch
      %57 = sbr.rel (0) target = $region65
    $region64: #{mybert_forward.1} parent=1 // pred_region
      _
    $region65: #{mybert_forward.1} parent=1 // pred_fallthru
      _
    // Predicated region
    $region66: #{mybert_forward.1} parent=1 // pred_check
      _
    $region67: #{mybert_forward.1} parent=1 // pred_check_branch
      %59 = sbr.rel (0) target = $region69
    $region68: #{mybert_forward.1} parent=1 // pred_region
      _
    $region69: #{mybert_forward.1} parent=1 // pred_fallthru
      _
    // Predicated region
    $region70: #{mybert_forward.1} parent=1 // pred_check
      _
    $region71: #{mybert_forward.1} parent=1 // pred_check_branch
      %61 = sbr.rel (0) target = $region73
    $region72: #{mybert_forward.1} parent=1 // pred_region
      _
    $region73: #{mybert_forward.1} parent=1 // pred_fallthru
      _
    // Predicated region
    $region74: #{mybert_forward.1} parent=1 // pred_check
      _
    $region75: #{mybert_forward.1} parent=1 // pred_check_branch
      %63 = sbr.rel (0) target = $region77
    $region76: #{mybert_forward.1} parent=1 // pred_region
      _
    $region77: #{mybert_forward.1} parent=1 // pred_fallthru
      _
    // Predicated region
    $region78: #{mybert_forward.1} parent=1 // pred_check
      _
    $region79: #{mybert_forward.1} parent=1 // pred_check_branch
      %65 = sbr.rel (0) target = $region81
    $region80: #{mybert_forward.1} parent=1 // pred_region
      _
    $region81: #{mybert_forward.1} parent=1 // pred_fallthru
      _
    %v67 = vld [vmem:[%s1] sm:$0xff]
    %v68 = vld [vmem:[%s1 + $0x8] sm:$0xff]
    %v69 = vld [vmem:[%s0] sm:$0xff]
    %v70 = vld [vmem:[%s0 + $0x8] sm:$0xff]
    %v71 = vld [vmem:[%s2] sm:$0x1]
    %v72 = vld [vmem:[%s3] sm:$0x1]
    %vm73 = vcmask 261120
    %v74 = vsel %vm73, %v69, 0.0
    %75 = vadd.xlane.f32.xlu0 %v74
    %v76 = vpop.xlane.xlu0 %75
    %v77 = vsel %vm73, %v70, 0.0
    %78 = vadd.xlane.f32.xlu0 %v77
    %v79 = vpop.xlane.xlu0 %78
    %v80 = vrcp.pop 32.0
    %v81 = vmul.f32 32.0, %v80
    %v82 = vsub.f32 1.0, %v81
    %v83 = vmul.f32 %v80, %v82
    %v84 = vadd.f32 %v80, %v83
    %vm85 = vweird.f32 %v80
    %v86 = vsel %vm85, %v80, %v84
    %v87 = vmul.f32 %v76, %v86
    %v88 = vmul.f32 %v79, %v86
    %v89 = vsub.f32 %v69, %v87
    %v90 = vsub.f32 %v70, %v88
    %v91 = vmul.f32 %v89, %v89
    %v92 = vmul.f32 %v90, %v90
    %v93 = vsel %vm73, %v91, 0.0
    %94 = vadd.xlane.f32.xlu0 %v93
    %v95 = vpop.xlane.xlu0 %94
    %v96 = vsel %vm73, %v92, 0.0
    %97 = vadd.xlane.f32.xlu0 %v96
    %v98 = vpop.xlane.xlu0 %97
    %v99 = vmul.f32 %v95, %v86
    %v100 = vmul.f32 %v98, %v86
    %v101 = vadd.f32 %v99, 1e-12
    %v102 = vadd.f32 %v100, 1e-12
    %v103 = vrsqrt.pop %v101
    %v104 = vmul.f32 %v103, %v101
    %v105 = vmul.f32 %v104, %v103
    %v106 = vmul.f32 0.5, %v105
    %v107 = vsub.f32 1.5, %v106
    %v108 = vmul.f32 %v103, %v107
    %vm109 = vweird.f32 %v101
    %vm110 = vweird.f32 %v103
    %vm111 = vmor %vm109, %vm110
    %v112 = vsel %vm111, %v103, %v108
    %v113 = vrsqrt.pop %v102
    %v114 = vmul.f32 %v113, %v102
    %v115 = vmul.f32 %v114, %v113
    %v116 = vmul.f32 0.5, %v115
    %v117 = vsub.f32 1.5, %v116
    %v118 = vmul.f32 %v113, %v117
    %vm119 = vweird.f32 %v102
    %vm120 = vweird.f32 %v113
    %vm121 = vmor %vm119, %vm120
    %v122 = vsel %vm121, %v113, %v118
    %v123 = vmul.f32 %v89, %v112
    %v124 = vmul.f32 %v90, %v122
    %v126 = vperm.slane %v71, 0
    %v128 = vmul.f32 %v123, %v126
    %v129 = vmul.f32 %v124, %v126
    %v131 = vperm.slane %v72, 0
    %v133 = vadd.f32 %v128, %v131
    %v134 = vadd.f32 %v129, %v131
    %v135 = vpack.c.bf16 %v134, %v133
    %v136 = vld [vmem:[%s4] sm:$0xf]
    %v137 = vld [vmem:[%s4 + $0x4] sm:$0xf]
    %v138 = vld [vmem:[%s4 + $0x8] sm:$0xf]
    %v139 = vld [vmem:[%s4 + $0xc] sm:$0xf]
    %v140 = vld [vmem:[%s5] sm:$0x1]
    %v142 = vperm.slane %v140, 0
    %v148 = vunpack.c.l.b16 %v136
    %v149 = vunpack.c.l.b16 %v137
    %v150 = vunpack.c.l.b16 %v138
    %v151 = vunpack.c.l.b16 %v139
    %v152 = vpack.c.b16 %v149, %v148
    %v153 = vpack.c.b16 %v151, %v150
    %v157 = vsel %vm73, %v135, 0
    %159 = vmatpush.bf16.msra.mxu0 0
    %160 = vmatpush.bf16.msra.mxu0 0
    %161 = vmatpush.bf16.msra.mxu0 0
    %162 = vmatpush.bf16.msra.mxu0 0
    %163 = vmatpush.bf16.msra.mxu0 0
    %164 = vmatpush.bf16.msra.mxu0 0
    %165 = vmatpush.bf16.msra.mxu0 %v153
    %166 = vmatpush.bf16.msra.mxu0 %v152
    %167 = vmatmul.bf16.gmra.mxu0 %v157
    %v168 = vpop.f32.mrf.mxu0
    %v169 = vadd.f32 %v142, %v168
    %v170 = vpop.f32.mrf.mxu0
    %v171 = vadd.f32 %v142, %v170
    %172 = vdwg.mxu0
    %175 = vrot.lane.b32.xlu0 %v169, 96
    %v176 = vpop.permute.xlu0 %175
    %177 = vrot.lane.b32.xlu0 %v171, 96
    %v178 = vpop.permute.xlu0 %177
    %181 = vxpose.xlu0.b32.start [1/16] %v176, 128
    %182 = vxpose.xlu0.b32.cont [2/16] %v178, 128
    %183 = vxpose.xlu0.b32.cont [3/16] 0.0, 128
    %184 = vxpose.xlu0.b32.cont [4/16] 0.0, 128
    %185 = vxpose.xlu0.b32.cont [5/16] 0.0, 128
    %186 = vxpose.xlu0.b32.cont [6/16] 0.0, 128
    %187 = vxpose.xlu0.b32.cont [7/16] 0.0, 128
    %188 = vxpose.xlu0.b32.cont [8/16] 0.0, 128
    %189 = vxpose.xlu0.b32.cont [9/16] 0.0, 128
    %190 = vxpose.xlu0.b32.cont [10/16] 0.0, 128
    %191 = vxpose.xlu0.b32.cont [11/16] 0.0, 128
    %192 = vxpose.xlu0.b32.cont [12/16] 0.0, 128
    %193 = vxpose.xlu0.b32.cont [13/16] 0.0, 128
    %194 = vxpose.xlu0.b32.cont [14/16] 0.0, 128
    %195 = vxpose.xlu0.b32.cont [15/16] 0.0, 128
    %196 = vxpose.xlu0.b32.end [16/16] 0.0, 128
    %v197 = vpop.trf.xlu0
    %v198 = vpop.trf.xlu0
    %v199 = vpop.trf.xlu0
    %v200 = vpop.trf.xlu0
    %v201 = vpop.trf.xlu0
    %v202 = vpop.trf.xlu0
    %v203 = vpop.trf.xlu0
    %v204 = vpop.trf.xlu0
    %v205 = vpop.trf.xlu0
    %v206 = vpop.trf.xlu0
    %v207 = vpop.trf.xlu0
    %v208 = vpop.trf.xlu0
    %v209 = vpop.trf.xlu0
    %v210 = vpop.trf.xlu0
    %v211 = vpop.trf.xlu0
    %v212 = vpop.trf.xlu0
    %v213 = vpack.c.bf16 %v171, %v169
    %v214 = vpack.c.bf16 %v198, %v197
    %vm215 = vcmask 130048
    %v217 = vsel %vm215, %v213, 0
    %219 = vmatpush.bf16.msra.mxu0 0
    %220 = vmatpush.bf16.msra.mxu0 0
    %221 = vmatpush.bf16.msra.mxu0 0
    %222 = vmatpush.bf16.msra.mxu0 0
    %223 = vmatpush.bf16.msra.mxu0 0
    %224 = vmatpush.bf16.msra.mxu0 0
    %225 = vmatpush.bf16.msra.mxu0 0
    %226 = vmatpush.bf16.msra.mxu0 %v214
    %227 = vmatmul.bf16.gmra.mxu0 %v217
    %v228 = vpop.f32.mrf.mxu0
    %v229 = vadd.f32 %v67, %v228
    %v230 = vpop.f32.mrf.mxu0
    %v231 = vadd.f32 %v68, %v230
    %232 = vdwg.mxu0
    %v233 = vsel %vm215, %v229, -inf
    %234 = vmax.xlane.f32.xlu0 %v233
    %v235 = vpop.xlane.xlu0 %234
    %v236 = vsel %vm215, %v231, -inf
    %237 = vmax.xlane.f32.xlu0 %v236
    %v238 = vpop.xlane.xlu0 %237
    %v239 = vsub.f32 %v229, %v235
    %v240 = vsub.f32 %v231, %v238
    %v241 = vmul.f32 %v239, 1.442695
    %v242 = vpow.pop %v241
    %v243 = vmul.f32 %v240, 1.442695
    %v244 = vpow.pop %v243
    %v245 = vsel %vm215, %v242, 0.0
    %246 = vadd.xlane.f32.xlu0 %v245
    %v247 = vpop.xlane.xlu0 %246
    %v248 = vsel %vm215, %v244, 0.0
    %249 = vadd.xlane.f32.xlu0 %v248
    %v250 = vpop.xlane.xlu0 %249
    %v251 = vrcp.pop %v247
    %v252 = vmul.f32 %v247, %v251
    %v253 = vsub.f32 1.0, %v252
    %v254 = vmul.f32 %v251, %v253
    %v255 = vadd.f32 %v251, %v254
    %vm256 = vweird.f32 %v247
    %vm257 = vweird.f32 %v251
    %vm258 = vmor %vm256, %vm257
    %v259 = vsel %vm258, %v251, %v255
    %v260 = vand.u32 2147483647, %v247
    %vm261 = vcmp.eq.f32.partialorder %v260, 8.507059e+37
    %v262 = vand.u32 %v247, 2147483648
    %v263 = vor.u32 1.1754944e-38, %v262
    %v264 = vsel %vm261, %v263, %v259
    %v265 = vmul.f32 1.0, %v264
    %v266 = vrcp.pop %v250
    %v267 = vmul.f32 %v250, %v266
    %v268 = vsub.f32 1.0, %v267
    %v269 = vmul.f32 %v266, %v268
    %v270 = vadd.f32 %v266, %v269
    %vm271 = vweird.f32 %v250
    %vm272 = vweird.f32 %v266
    %vm273 = vmor %vm271, %vm272
    %v274 = vsel %vm273, %v266, %v270
    %v275 = vand.u32 2147483647, %v250
    %vm276 = vcmp.eq.f32.partialorder %v275, 8.507059e+37
    %v277 = vand.u32 %v250, 2147483648
    %v278 = vor.u32 1.1754944e-38, %v277
    %v279 = vsel %vm276, %v278, %v274
    %v280 = vmul.f32 1.0, %v279
    %v281 = vmul.f32 %v242, %v265
    %v282 = vmul.f32 %v244, %v280
    %v283 = vpack.c.bf16 %v282, %v281
    %285 = vrot.lane.b32.xlu0 %v213, 64
    %v286 = vpop.permute.xlu0 %285
    %v289 = vsel %vm215, %v283, 0
    %291 = vmatpush.bf16.msra.mxu0 0
    %292 = vmatpush.bf16.msra.mxu0 0
    %293 = vmatpush.bf16.msra.mxu0 0
    %294 = vmatpush.bf16.msra.mxu0 0
    %295 = vmatpush.bf16.msra.mxu0 0
    %296 = vmatpush.bf16.msra.mxu0 0
    %297 = vmatpush.bf16.msra.mxu0 0
    %298 = vmatpush.bf16.msra.mxu0 %v286
    %299 = vmatmul.bf16.gmra.mxu0 %v289
    %v300 = vpop.f32.mrf.mxu0
    %v301 = vadd.f32 0.0, %v300
    %v302 = vpop.f32.mrf.mxu0
    %v303 = vadd.f32 0.0, %v302
    %304 = vdwg.mxu0
    %v305 = vpack.c.bf16 %v200, %v199
    %306 = vrot.lane.b32.xlu0 %v213, 112
    %v307 = vpop.permute.xlu0 %306
    %v309 = vsel %vm215, %v307, 0
    %311 = vmatpush.bf16.msra.mxu0 0
    %312 = vmatpush.bf16.msra.mxu0 0
    %313 = vmatpush.bf16.msra.mxu0 0
    %314 = vmatpush.bf16.msra.mxu0 0
    %315 = vmatpush.bf16.msra.mxu0 0
    %316 = vmatpush.bf16.msra.mxu0 0
    %317 = vmatpush.bf16.msra.mxu0 0
    %318 = vmatpush.bf16.msra.mxu0 %v305
    %319 = vmatmul.bf16.gmra.mxu0 %v309
    %v320 = vpop.f32.mrf.mxu0
    %v321 = vadd.f32 %v67, %v320
    %v322 = vpop.f32.mrf.mxu0
    %v323 = vadd.f32 %v68, %v322
    %324 = vdwg.mxu0
    %v325 = vsel %vm215, %v321, -inf
    %326 = vmax.xlane.f32.xlu0 %v325
    %v327 = vpop.xlane.xlu0 %326
    %v328 = vsel %vm215, %v323, -inf
    %329 = vmax.xlane.f32.xlu0 %v328
    %v330 = vpop.xlane.xlu0 %329
    %v331 = vsub.f32 %v321, %v327
    %v332 = vsub.f32 %v323, %v330
    %v333 = vmul.f32 %v331, 1.442695
    %v334 = vpow.pop %v333
    %v335 = vmul.f32 %v332, 1.442695
    %v336 = vpow.pop %v335
    %v337 = vsel %vm215, %v334, 0.0
    %338 = vadd.xlane.f32.xlu0 %v337
    %v339 = vpop.xlane.xlu0 %338
    %v340 = vsel %vm215, %v336, 0.0
    %341 = vadd.xlane.f32.xlu0 %v340
    %v342 = vpop.xlane.xlu0 %341
    %v343 = vrcp.pop %v339
    %v344 = vmul.f32 %v339, %v343
    %v345 = vsub.f32 1.0, %v344
    %v346 = vmul.f32 %v343, %v345
    %v347 = vadd.f32 %v343, %v346
    %vm348 = vweird.f32 %v339
    %vm349 = vweird.f32 %v343
    %vm350 = vmor %vm348, %vm349
    %v351 = vsel %vm350, %v343, %v347
    %v352 = vand.u32 2147483647, %v339
    %vm353 = vcmp.eq.f32.partialorder %v352, 8.507059e+37
    %v354 = vand.u32 %v339, 2147483648
    %v355 = vor.u32 1.1754944e-38, %v354
    %v356 = vsel %vm353, %v355, %v351
    %v357 = vmul.f32 1.0, %v356
    %v358 = vrcp.pop %v342
    %v359 = vmul.f32 %v342, %v358
    %v360 = vsub.f32 1.0, %v359
    %v361 = vmul.f32 %v358, %v360
    %v362 = vadd.f32 %v358, %v361
    %vm363 = vweird.f32 %v342
    %vm364 = vweird.f32 %v358
    %vm365 = vmor %vm363, %vm364
    %v366 = vsel %vm365, %v358, %v362
    %v367 = vand.u32 2147483647, %v342
    %vm368 = vcmp.eq.f32.partialorder %v367, 8.507059e+37
    %v369 = vand.u32 %v342, 2147483648
    %v370 = vor.u32 1.1754944e-38, %v369
    %v371 = vsel %vm368, %v370, %v366
    %v372 = vmul.f32 1.0, %v371
    %v373 = vmul.f32 %v334, %v357
    %v374 = vmul.f32 %v336, %v372
    %v375 = vpack.c.bf16 %v374, %v373
    %376 = vrot.lane.b32.xlu0 %v213, 48
    %v377 = vpop.permute.xlu0 %376
    %v380 = vsel %vm215, %v375, 0
    %382 = vmatpush.bf16.msra.mxu0 0
    %383 = vmatpush.bf16.msra.mxu0 0
    %384 = vmatpush.bf16.msra.mxu0 0
    %385 = vmatpush.bf16.msra.mxu0 0
    %386 = vmatpush.bf16.msra.mxu0 0
    %387 = vmatpush.bf16.msra.mxu0 0
    %388 = vmatpush.bf16.msra.mxu0 0
    %389 = vmatpush.bf16.msra.mxu0 %v377
    %390 = vmatmul.bf16.gmra.mxu0 %v380
    %v391 = vpop.f32.mrf.mxu0
    %v392 = vadd.f32 0.0, %v391
    %v393 = vpop.f32.mrf.mxu0
    %v394 = vadd.f32 0.0, %v393
    %395 = vdwg.mxu0
    %398 = vrot.lane.b32.xlu0 %v392, 16
    %v399 = vpop.permute.xlu0 %398
    %400 = vrot.lane.b32.xlu0 %v394, 16
    %v401 = vpop.permute.xlu0 %400
    %v404 = vsel %vm215, %v301, %v399
    %v405 = vsel %vm215, %v303, %v401
    %v406 = vpack.c.bf16 %v405, %v404
    %v407 = vld [vmem:[%s6] sm:$0xf]
    %v408 = vld [vmem:[%s6 + $0x4] sm:$0xf]
    %v409 = vld [vmem:[%s6 + $0x8] sm:$0xf]
    %v410 = vld [vmem:[%s6 + $0xc] sm:$0xf]
    %v411 = vld [vmem:[%s7] sm:$0x1]
    %v413 = vperm.slane %v411, 0
    %v419 = vunpack.c.l.b16 %v407
    %v420 = vunpack.c.l.b16 %v408
    %v421 = vunpack.c.l.b16 %v409
    %v422 = vunpack.c.l.b16 %v410
    %v423 = vpack.c.b16 %v420, %v419
    %v424 = vpack.c.b16 %v422, %v421
    %v428 = vsel %vm73, %v406, 0
    %430 = vmatpush.bf16.msra.mxu0 0
    %431 = vmatpush.bf16.msra.mxu0 0
    %432 = vmatpush.bf16.msra.mxu0 0
    %433 = vmatpush.bf16.msra.mxu0 0
    %434 = vmatpush.bf16.msra.mxu0 0
    %435 = vmatpush.bf16.msra.mxu0 0
    %436 = vmatpush.bf16.msra.mxu0 %v424
    %437 = vmatpush.bf16.msra.mxu0 %v423
    %438 = vmatmul.bf16.gmra.mxu0 %v428
    %v439 = vpop.f32.mrf.mxu0
    %v440 = vadd.f32 %v413, %v439
    %v441 = vpop.f32.mrf.mxu0
    %v442 = vadd.f32 %v413, %v441
    %443 = vdwg.mxu0
    %v444 = vadd.f32 %v133, %v440
    %v445 = vadd.f32 %v134, %v442
    %v446 = vld [vmem:[%s8] sm:$0x1]
    %v447 = vld [vmem:[%s9] sm:$0x1]
    %v448 = vsel %vm73, %v444, 0.0
    %449 = vadd.xlane.f32.xlu0 %v448
    %v450 = vpop.xlane.xlu0 %449
    %v451 = vsel %vm73, %v445, 0.0
    %452 = vadd.xlane.f32.xlu0 %v451
    %v453 = vpop.xlane.xlu0 %452
    %v454 = vmul.f32 %v450, %v86
    %v455 = vmul.f32 %v453, %v86
    %v456 = vsub.f32 %v444, %v454
    %v457 = vsub.f32 %v445, %v455
    %v458 = vmul.f32 %v456, %v456
    %v459 = vmul.f32 %v457, %v457
    %v460 = vsel %vm73, %v458, 0.0
    %461 = vadd.xlane.f32.xlu0 %v460
    %v462 = vpop.xlane.xlu0 %461
    %v463 = vsel %vm73, %v459, 0.0
    %464 = vadd.xlane.f32.xlu0 %v463
    %v465 = vpop.xlane.xlu0 %464
    %v466 = vmul.f32 %v462, %v86
    %v467 = vmul.f32 %v465, %v86
    %v468 = vadd.f32 %v466, 1e-12
    %v469 = vadd.f32 %v467, 1e-12
    %v470 = vrsqrt.pop %v468
    %v471 = vmul.f32 %v470, %v468
    %v472 = vmul.f32 %v471, %v470
    %v473 = vmul.f32 0.5, %v472
    %v474 = vsub.f32 1.5, %v473
    %v475 = vmul.f32 %v470, %v474
    %vm476 = vweird.f32 %v468
    %vm477 = vweird.f32 %v470
    %vm478 = vmor %vm476, %vm477
    %v479 = vsel %vm478, %v470, %v475
    %v480 = vrsqrt.pop %v469
    %v481 = vmul.f32 %v480, %v469
    %v482 = vmul.f32 %v481, %v480
    %v483 = vmul.f32 0.5, %v482
    %v484 = vsub.f32 1.5, %v483
    %v485 = vmul.f32 %v480, %v484
    %vm486 = vweird.f32 %v469
    %vm487 = vweird.f32 %v480
    %vm488 = vmor %vm486, %vm487
    %v489 = vsel %vm488, %v480, %v485
    %v490 = vmul.f32 %v456, %v479
    %v491 = vmul.f32 %v457, %v489
    %v493 = vperm.slane %v446, 0
    %v495 = vmul.f32 %v490, %v493
    %v496 = vmul.f32 %v491, %v493
    %v498 = vperm.slane %v447, 0
    %v500 = vadd.f32 %v495, %v498
    %v501 = vadd.f32 %v496, %v498
    %v502 = vpack.c.bf16 %v501, %v500
    %v503 = vld [vmem:[%s10] sm:$0xf]
    %v504 = vld [vmem:[%s10 + $0x4] sm:$0xf]
    %v505 = vld [vmem:[%s10 + $0x8] sm:$0xf]
    %v506 = vld [vmem:[%s10 + $0xc] sm:$0xf]
    %v507 = vld [vmem:[%s11] sm:$0x1]
    %v509 = vperm.slane %v507, 0
    %v515 = vunpack.c.l.b16 %v503
    %v516 = vunpack.c.l.b16 %v504
    %v517 = vunpack.c.l.b16 %v505
    %v518 = vunpack.c.l.b16 %v506
    %v519 = vpack.c.b16 %v516, %v515
    %v520 = vpack.c.b16 %v518, %v517
    %v524 = vsel %vm73, %v502, 0
    %526 = vmatpush.bf16.msra.mxu0 0
    %527 = vmatpush.bf16.msra.mxu0 0
    %528 = vmatpush.bf16.msra.mxu0 0
    %529 = vmatpush.bf16.msra.mxu0 0
    %530 = vmatpush.bf16.msra.mxu0 0
    %531 = vmatpush.bf16.msra.mxu0 0
    %532 = vmatpush.bf16.msra.mxu0 %v520
    %533 = vmatpush.bf16.msra.mxu0 %v519
    %534 = vmatmul.bf16.gmra.mxu0 %v524
    %v535 = vpop.f32.mrf.mxu0
    %v536 = vadd.f32 %v509, %v535
    %v537 = vpop.f32.mrf.mxu0
    %v538 = vadd.f32 %v509, %v537
    %539 = vdwg.mxu0
    %v540 = vmul.f32 %v536, 0.5
    %v541 = vmul.f32 %v538, 0.5
    %v542 = vmul.f32 %v536, 0.70710677
    %v543 = vmul.f32 %v538, 0.70710677
    %vm544 = vcmp.ge.f32.partialorder %v542, 0.0
    %vm545 = vcmp.ge.f32.partialorder %v543, 0.0
    %v546 = vsel %vm544, 1.0, -1.0
    %v547 = vsel %vm545, 1.0, -1.0
    %v548 = vand.u32 2147483647, %v542
    %v549 = vand.u32 2147483647, %v543
    %v550 = vmul.f32 %v548, 0.3275911
    %v551 = vmul.f32 %v549, 0.3275911
    %v552 = vadd.f32 %v550, 1.0
    %v553 = vadd.f32 %v551, 1.0
    %v554 = vrcp.pop %v552
    %v555 = vmul.f32 %v552, %v554
    %v556 = vsub.f32 1.0, %v555
    %v557 = vmul.f32 %v554, %v556
    %v558 = vadd.f32 %v554, %v557
    %vm559 = vweird.f32 %v552
    %vm560 = vweird.f32 %v554
    %vm561 = vmor %vm559, %vm560
    %v562 = vsel %vm561, %v554, %v558
    %v563 = vand.u32 2147483647, %v552
    %vm564 = vcmp.eq.f32.partialorder %v563, 8.507059e+37
    %v565 = vand.u32 %v552, 2147483648
    %v566 = vor.u32 1.1754944e-38, %v565
    %v567 = vsel %vm564, %v566, %v562
    %v568 = vmul.f32 1.0, %v567
    %v569 = vrcp.pop %v553
    %v570 = vmul.f32 %v553, %v569
    %v571 = vsub.f32 1.0, %v570
    %v572 = vmul.f32 %v569, %v571
    %v573 = vadd.f32 %v569, %v572
    %vm574 = vweird.f32 %v553
    %vm575 = vweird.f32 %v569
    %vm576 = vmor %vm574, %vm575
    %v577 = vsel %vm576, %v569, %v573
    %v578 = vand.u32 2147483647, %v553
    %vm579 = vcmp.eq.f32.partialorder %v578, 8.507059e+37
    %v580 = vand.u32 %v553, 2147483648
    %v581 = vor.u32 1.1754944e-38, %v580
    %v582 = vsel %vm579, %v581, %v577
    %v583 = vmul.f32 1.0, %v582
    %v584 = vmul.f32 %v568, 1.0614054
    %v585 = vmul.f32 %v583, 1.0614054
    %v586 = vadd.f32 %v584, -1.4531521
    %v587 = vadd.f32 %v585, -1.4531521
    %v588 = vmul.f32 %v586, %v568
    %v589 = vmul.f32 %v587, %v583
    %v590 = vadd.f32 %v588, 1.4214138
    %v591 = vadd.f32 %v589, 1.4214138
    %v592 = vmul.f32 %v590, %v568
    %v593 = vmul.f32 %v591, %v583
    %v594 = vadd.f32 %v592, -0.28449672
    %v595 = vadd.f32 %v593, -0.28449672
    %v596 = vmul.f32 %v594, %v568
    %v597 = vmul.f32 %v595, %v583
    %v598 = vadd.f32 %v596, 0.2548296
    %v599 = vadd.f32 %v597, 0.2548296
    %v600 = vmul.f32 %v598, %v568
    %v601 = vmul.f32 %v599, %v583
    %v602 = vsub.f32 0.0, %v548
    %v603 = vsub.f32 0.0, %v549
    %v604 = vmul.f32 %v602, %v548
    %v605 = vmul.f32 %v603, %v549
    %v606 = vmul.f32 %v604, 1.442695
    %v607 = vpow.pop %v606
    %v608 = vmul.f32 %v605, 1.442695
    %v609 = vpow.pop %v608
    %v610 = vmul.f32 %v600, %v607
    %v611 = vmul.f32 %v601, %v609
    %v612 = vsub.f32 1.0, %v610
    %v613 = vsub.f32 1.0, %v611
    %v614 = vmul.f32 %v546, %v612
    %v615 = vmul.f32 %v547, %v613
    %v616 = vadd.f32 %v614, 1.0
    %v617 = vadd.f32 %v615, 1.0
    %v618 = vmul.f32 %v540, %v616
    %v619 = vmul.f32 %v541, %v617
    %v620 = vpack.c.bf16 %v619, %v618
    %v621 = vld [vmem:[%s12] sm:$0xf]
    %v622 = vld [vmem:[%s12 + $0x4] sm:$0xf]
    %v623 = vld [vmem:[%s12 + $0x8] sm:$0xf]
    %v624 = vld [vmem:[%s12 + $0xc] sm:$0xf]
    %v625 = vld [vmem:[%s12 + $0x10] sm:$0xf]
    %v626 = vld [vmem:[%s12 + $0x14] sm:$0xf]
    %v627 = vld [vmem:[%s12 + $0x18] sm:$0xf]
    %v628 = vld [vmem:[%s12 + $0x1c] sm:$0xf]
    %v629 = vld [vmem:[%s13] sm:$0x1]
    %v631 = vperm.slane %v629, 0
    %v641 = vunpack.c.l.b16 %v621
    %v642 = vunpack.c.l.b16 %v622
    %v643 = vunpack.c.l.b16 %v623
    %v644 = vunpack.c.l.b16 %v624
    %v645 = vunpack.c.l.b16 %v625
    %v646 = vunpack.c.l.b16 %v626
    %v647 = vunpack.c.l.b16 %v627
    %v648 = vunpack.c.l.b16 %v628
    %v649 = vpack.c.b16 %v642, %v641
    %v650 = vpack.c.b16 %v644, %v643
    %v651 = vpack.c.b16 %v646, %v645
    %v652 = vpack.c.b16 %v648, %v647
    %vm657 = vcmask 523264
    %v659 = vsel %vm657, %v620, 0
    %661 = vmatpush.bf16.msra.mxu0 0
    %662 = vmatpush.bf16.msra.mxu0 0
    %663 = vmatpush.bf16.msra.mxu0 0
    %664 = vmatpush.bf16.msra.mxu0 0
    %665 = vmatpush.bf16.msra.mxu0 %v652
    %666 = vmatpush.bf16.msra.mxu0 %v651
    %667 = vmatpush.bf16.msra.mxu0 %v650
    %668 = vmatpush.bf16.msra.mxu0 %v649
    %669 = vmatmul.bf16.gmra.mxu0 %v659
    %v670 = vpop.f32.mrf.mxu0
    %v671 = vadd.f32 %v631, %v670
    %v672 = vpop.f32.mrf.mxu0
    %v673 = vadd.f32 %v631, %v672
    %674 = vdwg.mxu0
    %v675 = vadd.f32 %v500, %v671
    %v676 = vadd.f32 %v501, %v673
    %v677 = vld [vmem:[%s14] sm:$0x1]
    %v678 = vld [vmem:[%s15] sm:$0x1]
    %v679 = vsel %vm73, %v675, 0.0
    %680 = vadd.xlane.f32.xlu0 %v679
    %v681 = vpop.xlane.xlu0 %680
    %v682 = vsel %vm73, %v676, 0.0
    %683 = vadd.xlane.f32.xlu0 %v682
    %v684 = vpop.xlane.xlu0 %683
    %v685 = vmul.f32 %v681, %v86
    %v686 = vmul.f32 %v684, %v86
    %v687 = vsub.f32 %v675, %v685
    %v688 = vsub.f32 %v676, %v686
    %v689 = vmul.f32 %v687, %v687
    %v690 = vmul.f32 %v688, %v688
    %v691 = vsel %vm73, %v689, 0.0
    %692 = vadd.xlane.f32.xlu0 %v691
    %v693 = vpop.xlane.xlu0 %692
    %v694 = vsel %vm73, %v690, 0.0
    %695 = vadd.xlane.f32.xlu0 %v694
    %v696 = vpop.xlane.xlu0 %695
    %v697 = vmul.f32 %v693, %v86
    %v698 = vmul.f32 %v696, %v86
    %v699 = vadd.f32 %v697, 1e-12
    %v700 = vadd.f32 %v698, 1e-12
    %v701 = vrsqrt.pop %v699
    %v702 = vmul.f32 %v701, %v699
    %v703 = vmul.f32 %v702, %v701
    %v704 = vmul.f32 0.5, %v703
    %v705 = vsub.f32 1.5, %v704
    %v706 = vmul.f32 %v701, %v705
    %vm707 = vweird.f32 %v699
    %vm708 = vweird.f32 %v701
    %vm709 = vmor %vm707, %vm708
    %v710 = vsel %vm709, %v701, %v706
    %v711 = vrsqrt.pop %v700
    %v712 = vmul.f32 %v711, %v700
    %v713 = vmul.f32 %v712, %v711
    %v714 = vmul.f32 0.5, %v713
    %v715 = vsub.f32 1.5, %v714
    %v716 = vmul.f32 %v711, %v715
    %vm717 = vweird.f32 %v700
    %vm718 = vweird.f32 %v711
    %vm719 = vmor %vm717, %vm718
    %v720 = vsel %vm719, %v711, %v716
    %v721 = vmul.f32 %v687, %v710
    %v722 = vmul.f32 %v688, %v720
    %v724 = vperm.slane %v677, 0
    %v726 = vmul.f32 %v721, %v724
    %v727 = vmul.f32 %v722, %v724
    %v729 = vperm.slane %v678, 0
    %v731 = vadd.f32 %v726, %v729
    %v732 = vadd.f32 %v727, %v729
    %v733 = vpack.c.bf16 %v732, %v731
    %s734 = scalar_lea.vmem %s4, 16
    %v735 = vld [vmem:[%s734] sm:$0xf]
    %v736 = vld [vmem:[%s734 + $0x4] sm:$0xf]
    %v737 = vld [vmem:[%s734 + $0x8] sm:$0xf]
    %v738 = vld [vmem:[%s734 + $0xc] sm:$0xf]
    %s739 = scalar_lea.vmem %s5, 1
    %v740 = vld [vmem:[%s739] sm:$0x1]
    %v742 = vperm.slane %v740, 0
    %v748 = vunpack.c.l.b16 %v735
    %v749 = vunpack.c.l.b16 %v736
    %v750 = vunpack.c.l.b16 %v737
    %v751 = vunpack.c.l.b16 %v738
    %v752 = vpack.c.b16 %v749, %v748
    %v753 = vpack.c.b16 %v751, %v750
    %v757 = vsel %vm73, %v733, 0
    %759 = vmatpush.bf16.msra.mxu0 0
    %760 = vmatpush.bf16.msra.mxu0 0
    %761 = vmatpush.bf16.msra.mxu0 0
    %762 = vmatpush.bf16.msra.mxu0 0
    %763 = vmatpush.bf16.msra.mxu0 0
    %764 = vmatpush.bf16.msra.mxu0 0
    %765 = vmatpush.bf16.msra.mxu0 %v753
    %766 = vmatpush.bf16.msra.mxu0 %v752
    %767 = vmatmul.bf16.gmra.mxu0 %v757
    %v768 = vpop.f32.mrf.mxu0
    %v769 = vadd.f32 %v742, %v768
    %v770 = vpop.f32.mrf.mxu0
    %v771 = vadd.f32 %v742, %v770
    %772 = vdwg.mxu0
    %775 = vrot.lane.b32.xlu0 %v769, 96
    %v776 = vpop.permute.xlu0 %775
    %777 = vrot.lane.b32.xlu0 %v771, 96
    %v778 = vpop.permute.xlu0 %777
    %781 = vxpose.xlu0.b32.start [1/16] %v776, 128
    %782 = vxpose.xlu0.b32.cont [2/16] %v778, 128
    %783 = vxpose.xlu0.b32.cont [3/16] 0.0, 128
    %784 = vxpose.xlu0.b32.cont [4/16] 0.0, 128
    %785 = vxpose.xlu0.b32.cont [5/16] 0.0, 128
    %786 = vxpose.xlu0.b32.cont [6/16] 0.0, 128
    %787 = vxpose.xlu0.b32.cont [7/16] 0.0, 128
    %788 = vxpose.xlu0.b32.cont [8/16] 0.0, 128
    %789 = vxpose.xlu0.b32.cont [9/16] 0.0, 128
    %790 = vxpose.xlu0.b32.cont [10/16] 0.0, 128
    %791 = vxpose.xlu0.b32.cont [11/16] 0.0, 128
    %792 = vxpose.xlu0.b32.cont [12/16] 0.0, 128
    %793 = vxpose.xlu0.b32.cont [13/16] 0.0, 128
    %794 = vxpose.xlu0.b32.cont [14/16] 0.0, 128
    %795 = vxpose.xlu0.b32.cont [15/16] 0.0, 128
    %796 = vxpose.xlu0.b32.end [16/16] 0.0, 128
    %v797 = vpop.trf.xlu0
    %v798 = vpop.trf.xlu0
    %v799 = vpop.trf.xlu0
    %v800 = vpop.trf.xlu0
    %v801 = vpop.trf.xlu0
    %v802 = vpop.trf.xlu0
    %v803 = vpop.trf.xlu0
    %v804 = vpop.trf.xlu0
    %v805 = vpop.trf.xlu0
    %v806 = vpop.trf.xlu0
    %v807 = vpop.trf.xlu0
    %v808 = vpop.trf.xlu0
    %v809 = vpop.trf.xlu0
    %v810 = vpop.trf.xlu0
    %v811 = vpop.trf.xlu0
    %v812 = vpop.trf.xlu0
    %v813 = vpack.c.bf16 %v771, %v769
    %v814 = vpack.c.bf16 %v798, %v797
    %v816 = vsel %vm215, %v813, 0
    %818 = vmatpush.bf16.msra.mxu0 0
    %819 = vmatpush.bf16.msra.mxu0 0
    %820 = vmatpush.bf16.msra.mxu0 0
    %821 = vmatpush.bf16.msra.mxu0 0
    %822 = vmatpush.bf16.msra.mxu0 0
    %823 = vmatpush.bf16.msra.mxu0 0
    %824 = vmatpush.bf16.msra.mxu0 0
    %825 = vmatpush.bf16.msra.mxu0 %v814
    %826 = vmatmul.bf16.gmra.mxu0 %v816
    %v827 = vpop.f32.mrf.mxu0
    %v828 = vadd.f32 %v67, %v827
    %v829 = vpop.f32.mrf.mxu0
    %v830 = vadd.f32 %v68, %v829
    %831 = vdwg.mxu0
    %v832 = vsel %vm215, %v828, -inf
    %833 = vmax.xlane.f32.xlu0 %v832
    %v834 = vpop.xlane.xlu0 %833
    %v835 = vsel %vm215, %v830, -inf
    %836 = vmax.xlane.f32.xlu0 %v835
    %v837 = vpop.xlane.xlu0 %836
    %v838 = vsub.f32 %v828, %v834
    %v839 = vsub.f32 %v830, %v837
    %v840 = vmul.f32 %v838, 1.442695
    %v841 = vpow.pop %v840
    %v842 = vmul.f32 %v839, 1.442695
    %v843 = vpow.pop %v842
    %v844 = vsel %vm215, %v841, 0.0
    %845 = vadd.xlane.f32.xlu0 %v844
    %v846 = vpop.xlane.xlu0 %845
    %v847 = vsel %vm215, %v843, 0.0
    %848 = vadd.xlane.f32.xlu0 %v847
    %v849 = vpop.xlane.xlu0 %848
    %v850 = vrcp.pop %v846
    %v851 = vmul.f32 %v846, %v850
    %v852 = vsub.f32 1.0, %v851
    %v853 = vmul.f32 %v850, %v852
    %v854 = vadd.f32 %v850, %v853
    %vm855 = vweird.f32 %v846
    %vm856 = vweird.f32 %v850
    %vm857 = vmor %vm855, %vm856
    %v858 = vsel %vm857, %v850, %v854
    %v859 = vand.u32 2147483647, %v846
    %vm860 = vcmp.eq.f32.partialorder %v859, 8.507059e+37
    %v861 = vand.u32 %v846, 2147483648
    %v862 = vor.u32 1.1754944e-38, %v861
    %v863 = vsel %vm860, %v862, %v858
    %v864 = vmul.f32 1.0, %v863
    %v865 = vrcp.pop %v849
    %v866 = vmul.f32 %v849, %v865
    %v867 = vsub.f32 1.0, %v866
    %v868 = vmul.f32 %v865, %v867
    %v869 = vadd.f32 %v865, %v868
    %vm870 = vweird.f32 %v849
    %vm871 = vweird.f32 %v865
    %vm872 = vmor %vm870, %vm871
    %v873 = vsel %vm872, %v865, %v869
    %v874 = vand.u32 2147483647, %v849
    %vm875 = vcmp.eq.f32.partialorder %v874, 8.507059e+37
    %v876 = vand.u32 %v849, 2147483648
    %v877 = vor.u32 1.1754944e-38, %v876
    %v878 = vsel %vm875, %v877, %v873
    %v879 = vmul.f32 1.0, %v878
    %v880 = vmul.f32 %v841, %v864
    %v881 = vmul.f32 %v843, %v879
    %v882 = vpack.c.bf16 %v881, %v880
    %884 = vrot.lane.b32.xlu0 %v813, 64
    %v885 = vpop.permute.xlu0 %884
    %v888 = vsel %vm215, %v882, 0
    %890 = vmatpush.bf16.msra.mxu0 0
    %891 = vmatpush.bf16.msra.mxu0 0
    %892 = vmatpush.bf16.msra.mxu0 0
    %893 = vmatpush.bf16.msra.mxu0 0
    %894 = vmatpush.bf16.msra.mxu0 0
    %895 = vmatpush.bf16.msra.mxu0 0
    %896 = vmatpush.bf16.msra.mxu0 0
    %897 = vmatpush.bf16.msra.mxu0 %v885
    %898 = vmatmul.bf16.gmra.mxu0 %v888
    %v899 = vpop.f32.mrf.mxu0
    %v900 = vadd.f32 0.0, %v899
    %v901 = vpop.f32.mrf.mxu0
    %v902 = vadd.f32 0.0, %v901
    %903 = vdwg.mxu0
    %v904 = vpack.c.bf16 %v800, %v799
    %905 = vrot.lane.b32.xlu0 %v813, 112
    %v906 = vpop.permute.xlu0 %905
    %v908 = vsel %vm215, %v906, 0
    %910 = vmatpush.bf16.msra.mxu0 0
    %911 = vmatpush.bf16.msra.mxu0 0
    %912 = vmatpush.bf16.msra.mxu0 0
    %913 = vmatpush.bf16.msra.mxu0 0
    %914 = vmatpush.bf16.msra.mxu0 0
    %915 = vmatpush.bf16.msra.mxu0 0
    %916 = vmatpush.bf16.msra.mxu0 0
    %917 = vmatpush.bf16.msra.mxu0 %v904
    %918 = vmatmul.bf16.gmra.mxu0 %v908
    %v919 = vpop.f32.mrf.mxu0
    %v920 = vadd.f32 %v67, %v919
    %v921 = vpop.f32.mrf.mxu0
    %v922 = vadd.f32 %v68, %v921
    %923 = vdwg.mxu0
    %v924 = vsel %vm215, %v920, -inf
    %925 = vmax.xlane.f32.xlu0 %v924
    %v926 = vpop.xlane.xlu0 %925
    %v927 = vsel %vm215, %v922, -inf
    %928 = vmax.xlane.f32.xlu0 %v927
    %v929 = vpop.xlane.xlu0 %928
    %v930 = vsub.f32 %v920, %v926
    %v931 = vsub.f32 %v922, %v929
    %v932 = vmul.f32 %v930, 1.442695
    %v933 = vpow.pop %v932
    %v934 = vmul.f32 %v931, 1.442695
    %v935 = vpow.pop %v934
    %v936 = vsel %vm215, %v933, 0.0
    %937 = vadd.xlane.f32.xlu0 %v936
    %v938 = vpop.xlane.xlu0 %937
    %v939 = vsel %vm215, %v935, 0.0
    %940 = vadd.xlane.f32.xlu0 %v939
    %v941 = vpop.xlane.xlu0 %940
    %v942 = vrcp.pop %v938
    %v943 = vmul.f32 %v938, %v942
    %v944 = vsub.f32 1.0, %v943
    %v945 = vmul.f32 %v942, %v944
    %v946 = vadd.f32 %v942, %v945
    %vm947 = vweird.f32 %v938
    %vm948 = vweird.f32 %v942
    %vm949 = vmor %vm947, %vm948
    %v950 = vsel %vm949, %v942, %v946
    %v951 = vand.u32 2147483647, %v938
    %vm952 = vcmp.eq.f32.partialorder %v951, 8.507059e+37
    %v953 = vand.u32 %v938, 2147483648
    %v954 = vor.u32 1.1754944e-38, %v953
    %v955 = vsel %vm952, %v954, %v950
    %v956 = vmul.f32 1.0, %v955
    %v957 = vrcp.pop %v941
    %v958 = vmul.f32 %v941, %v957
    %v959 = vsub.f32 1.0, %v958
    %v960 = vmul.f32 %v957, %v959
    %v961 = vadd.f32 %v957, %v960
    %vm962 = vweird.f32 %v941
    %vm963 = vweird.f32 %v957
    %vm964 = vmor %vm962, %vm963
    %v965 = vsel %vm964, %v957, %v961
    %v966 = vand.u32 2147483647, %v941
    %vm967 = vcmp.eq.f32.partialorder %v966, 8.507059e+37
    %v968 = vand.u32 %v941, 2147483648
    %v969 = vor.u32 1.1754944e-38, %v968
    %v970 = vsel %vm967, %v969, %v965
    %v971 = vmul.f32 1.0, %v970
    %v972 = vmul.f32 %v933, %v956
    %v973 = vmul.f32 %v935, %v971
    %v974 = vpack.c.bf16 %v973, %v972
    %975 = vrot.lane.b32.xlu0 %v813, 48
    %v976 = vpop.permute.xlu0 %975
    %v979 = vsel %vm215, %v974, 0
    %981 = vmatpush.bf16.msra.mxu0 0
    %982 = vmatpush.bf16.msra.mxu0 0
    %983 = vmatpush.bf16.msra.mxu0 0
    %984 = vmatpush.bf16.msra.mxu0 0
    %985 = vmatpush.bf16.msra.mxu0 0
    %986 = vmatpush.bf16.msra.mxu0 0
    %987 = vmatpush.bf16.msra.mxu0 0
    %988 = vmatpush.bf16.msra.mxu0 %v976
    %989 = vmatmul.bf16.gmra.mxu0 %v979
    %v990 = vpop.f32.mrf.mxu0
    %v991 = vadd.f32 0.0, %v990
    %v992 = vpop.f32.mrf.mxu0
    %v993 = vadd.f32 0.0, %v992
    %994 = vdwg.mxu0
    %997 = vrot.lane.b32.xlu0 %v991, 16
    %v998 = vpop.permute.xlu0 %997
    %999 = vrot.lane.b32.xlu0 %v993, 16
    %v1000 = vpop.permute.xlu0 %999
    %v1003 = vsel %vm215, %v900, %v998
    %v1004 = vsel %vm215, %v902, %v1000
    %v1005 = vpack.c.bf16 %v1004, %v1003
    %s1006 = scalar_lea.vmem %s6, 16
    %v1007 = vld [vmem:[%s1006] sm:$0xf]
    %v1008 = vld [vmem:[%s1006 + $0x4] sm:$0xf]
    %v1009 = vld [vmem:[%s1006 + $0x8] sm:$0xf]
    %v1010 = vld [vmem:[%s1006 + $0xc] sm:$0xf]
    %s1011 = scalar_lea.vmem %s7, 1
    %v1012 = vld [vmem:[%s1011] sm:$0x1]
    %v1014 = vperm.slane %v1012, 0
    %v1020 = vunpack.c.l.b16 %v1007
    %v1021 = vunpack.c.l.b16 %v1008
    %v1022 = vunpack.c.l.b16 %v1009
    %v1023 = vunpack.c.l.b16 %v1010
    %v1024 = vpack.c.b16 %v1021, %v1020
    %v1025 = vpack.c.b16 %v1023, %v1022
    %v1029 = vsel %vm73, %v1005, 0
    %1031 = vmatpush.bf16.msra.mxu0 0
    %1032 = vmatpush.bf16.msra.mxu0 0
    %1033 = vmatpush.bf16.msra.mxu0 0
    %1034 = vmatpush.bf16.msra.mxu0 0
    %1035 = vmatpush.bf16.msra.mxu0 0
    %1036 = vmatpush.bf16.msra.mxu0 0
    %1037 = vmatpush.bf16.msra.mxu0 %v1025
    %1038 = vmatpush.bf16.msra.mxu0 %v1024
    %1039 = vmatmul.bf16.gmra.mxu0 %v1029
    %v1040 = vpop.f32.mrf.mxu0
    %v1041 = vadd.f32 %v1014, %v1040
    %v1042 = vpop.f32.mrf.mxu0
    %v1043 = vadd.f32 %v1014, %v1042
    %1044 = vdwg.mxu0
    %v1045 = vadd.f32 %v731, %v1041
    %v1046 = vadd.f32 %v732, %v1043
    %s1047 = scalar_lea.vmem %s8, 1
    %v1048 = vld [vmem:[%s1047] sm:$0x1]
    %s1049 = scalar_lea.vmem %s9, 1
    %v1050 = vld [vmem:[%s1049] sm:$0x1]
    %v1051 = vsel %vm73, %v1045, 0.0
    %1052 = vadd.xlane.f32.xlu0 %v1051
    %v1053 = vpop.xlane.xlu0 %1052
    %v1054 = vsel %vm73, %v1046, 0.0
    %1055 = vadd.xlane.f32.xlu0 %v1054
    %v1056 = vpop.xlane.xlu0 %1055
    %v1057 = vmul.f32 %v1053, %v86
    %v1058 = vmul.f32 %v1056, %v86
    %v1059 = vsub.f32 %v1045, %v1057
    %v1060 = vsub.f32 %v1046, %v1058
    %v1061 = vmul.f32 %v1059, %v1059
    %v1062 = vmul.f32 %v1060, %v1060
    %v1063 = vsel %vm73, %v1061, 0.0
    %1064 = vadd.xlane.f32.xlu0 %v1063
    %v1065 = vpop.xlane.xlu0 %1064
    %v1066 = vsel %vm73, %v1062, 0.0
    %1067 = vadd.xlane.f32.xlu0 %v1066
    %v1068 = vpop.xlane.xlu0 %1067
    %v1069 = vmul.f32 %v1065, %v86
    %v1070 = vmul.f32 %v1068, %v86
    %v1071 = vadd.f32 %v1069, 1e-12
    %v1072 = vadd.f32 %v1070, 1e-12
    %v1073 = vrsqrt.pop %v1071
    %v1074 = vmul.f32 %v1073, %v1071
    %v1075 = vmul.f32 %v1074, %v1073
    %v1076 = vmul.f32 0.5, %v1075
    %v1077 = vsub.f32 1.5, %v1076
    %v1078 = vmul.f32 %v1073, %v1077
    %vm1079 = vweird.f32 %v1071
    %vm1080 = vweird.f32 %v1073
    %vm1081 = vmor %vm1079, %vm1080
    %v1082 = vsel %vm1081, %v1073, %v1078
    %v1083 = vrsqrt.pop %v1072
    %v1084 = vmul.f32 %v1083, %v1072
    %v1085 = vmul.f32 %v1084, %v1083
    %v1086 = vmul.f32 0.5, %v1085
    %v1087 = vsub.f32 1.5, %v1086
    %v1088 = vmul.f32 %v1083, %v1087
    %vm1089 = vweird.f32 %v1072
    %vm1090 = vweird.f32 %v1083
    %vm1091 = vmor %vm1089, %vm1090
    %v1092 = vsel %vm1091, %v1083, %v1088
    %v1093 = vmul.f32 %v1059, %v1082
    %v1094 = vmul.f32 %v1060, %v1092
    %v1096 = vperm.slane %v1048, 0
    %v1098 = vmul.f32 %v1093, %v1096
    %v1099 = vmul.f32 %v1094, %v1096
    %v1101 = vperm.slane %v1050, 0
    %v1103 = vadd.f32 %v1098, %v1101
    %v1104 = vadd.f32 %v1099, %v1101
    %v1105 = vpack.c.bf16 %v1104, %v1103
    %s1106 = scalar_lea.vmem %s10, 16
    %v1107 = vld [vmem:[%s1106] sm:$0xf]
    %v1108 = vld [vmem:[%s1106 + $0x4] sm:$0xf]
    %v1109 = vld [vmem:[%s1106 + $0x8] sm:$0xf]
    %v1110 = vld [vmem:[%s1106 + $0xc] sm:$0xf]
    %s1111 = scalar_lea.vmem %s11, 1
    %v1112 = vld [vmem:[%s1111] sm:$0x1]
    %v1114 = vperm.slane %v1112, 0
    %v1120 = vunpack.c.l.b16 %v1107
    %v1121 = vunpack.c.l.b16 %v1108
    %v1122 = vunpack.c.l.b16 %v1109
    %v1123 = vunpack.c.l.b16 %v1110
    %v1124 = vpack.c.b16 %v1121, %v1120
    %v1125 = vpack.c.b16 %v1123, %v1122
    %v1129 = vsel %vm73, %v1105, 0
    %1131 = vmatpush.bf16.msra.mxu0 0
    %1132 = vmatpush.bf16.msra.mxu0 0
    %1133 = vmatpush.bf16.msra.mxu0 0
    %1134 = vmatpush.bf16.msra.mxu0 0
    %1135 = vmatpush.bf16.msra.mxu0 0
    %1136 = vmatpush.bf16.msra.mxu0 0
    %1137 = vmatpush.bf16.msra.mxu0 %v1125
    %1138 = vmatpush.bf16.msra.mxu0 %v1124
    %1139 = vmatmul.bf16.gmra.mxu0 %v1129
    %v1140 = vpop.f32.mrf.mxu0
    %v1141 = vadd.f32 %v1114, %v1140
    %v1142 = vpop.f32.mrf.mxu0
    %v1143 = vadd.f32 %v1114, %v1142
    %1144 = vdwg.mxu0
    %v1145 = vmul.f32 %v1141, 0.5
    %v1146 = vmul.f32 %v1143, 0.5
    %v1147 = vmul.f32 %v1141, 0.70710677
    %v1148 = vmul.f32 %v1143, 0.70710677
    %vm1149 = vcmp.ge.f32.partialorder %v1147, 0.0
    %vm1150 = vcmp.ge.f32.partialorder %v1148, 0.0
    %v1151 = vsel %vm1149, 1.0, -1.0
    %v1152 = vsel %vm1150, 1.0, -1.0
    %v1153 = vand.u32 2147483647, %v1147
    %v1154 = vand.u32 2147483647, %v1148
    %v1155 = vmul.f32 %v1153, 0.3275911
    %v1156 = vmul.f32 %v1154, 0.3275911
    %v1157 = vadd.f32 %v1155, 1.0
    %v1158 = vadd.f32 %v1156, 1.0
    %v1159 = vrcp.pop %v1157
    %v1160 = vmul.f32 %v1157, %v1159
    %v1161 = vsub.f32 1.0, %v1160
    %v1162 = vmul.f32 %v1159, %v1161
    %v1163 = vadd.f32 %v1159, %v1162
    %vm1164 = vweird.f32 %v1157
    %vm1165 = vweird.f32 %v1159
    %vm1166 = vmor %vm1164, %vm1165
    %v1167 = vsel %vm1166, %v1159, %v1163
    %v1168 = vand.u32 2147483647, %v1157
    %vm1169 = vcmp.eq.f32.partialorder %v1168, 8.507059e+37
    %v1170 = vand.u32 %v1157, 2147483648
    %v1171 = vor.u32 1.1754944e-38, %v1170
    %v1172 = vsel %vm1169, %v1171, %v1167
    %v1173 = vmul.f32 1.0, %v1172
    %v1174 = vrcp.pop %v1158
    %v1175 = vmul.f32 %v1158, %v1174
    %v1176 = vsub.f32 1.0, %v1175
    %v1177 = vmul.f32 %v1174, %v1176
    %v1178 = vadd.f32 %v1174, %v1177
    %vm1179 = vweird.f32 %v1158
    %vm1180 = vweird.f32 %v1174
    %vm1181 = vmor %vm1179, %vm1180
    %v1182 = vsel %vm1181, %v1174, %v1178
    %v1183 = vand.u32 2147483647, %v1158
    %vm1184 = vcmp.eq.f32.partialorder %v1183, 8.507059e+37
    %v1185 = vand.u32 %v1158, 2147483648
    %v1186 = vor.u32 1.1754944e-38, %v1185
    %v1187 = vsel %vm1184, %v1186, %v1182
    %v1188 = vmul.f32 1.0, %v1187
    %v1189 = vmul.f32 %v1173, 1.0614054
    %v1190 = vmul.f32 %v1188, 1.0614054
    %v1191 = vadd.f32 %v1189, -1.4531521
    %v1192 = vadd.f32 %v1190, -1.4531521
    %v1193 = vmul.f32 %v1191, %v1173
    %v1194 = vmul.f32 %v1192, %v1188
    %v1195 = vadd.f32 %v1193, 1.4214138
    %v1196 = vadd.f32 %v1194, 1.4214138
    %v1197 = vmul.f32 %v1195, %v1173
    %v1198 = vmul.f32 %v1196, %v1188
    %v1199 = vadd.f32 %v1197, -0.28449672
    %v1200 = vadd.f32 %v1198, -0.28449672
    %v1201 = vmul.f32 %v1199, %v1173
    %v1202 = vmul.f32 %v1200, %v1188
    %v1203 = vadd.f32 %v1201, 0.2548296
    %v1204 = vadd.f32 %v1202, 0.2548296
    %v1205 = vmul.f32 %v1203, %v1173
    %v1206 = vmul.f32 %v1204, %v1188
    %v1207 = vsub.f32 0.0, %v1153
    %v1208 = vsub.f32 0.0, %v1154
    %v1209 = vmul.f32 %v1207, %v1153
    %v1210 = vmul.f32 %v1208, %v1154
    %v1211 = vmul.f32 %v1209, 1.442695
    %v1212 = vpow.pop %v1211
    %v1213 = vmul.f32 %v1210, 1.442695
    %v1214 = vpow.pop %v1213
    %v1215 = vmul.f32 %v1205, %v1212
    %v1216 = vmul.f32 %v1206, %v1214
    %v1217 = vsub.f32 1.0, %v1215
    %v1218 = vsub.f32 1.0, %v1216
    %v1219 = vmul.f32 %v1151, %v1217
    %v1220 = vmul.f32 %v1152, %v1218
    %v1221 = vadd.f32 %v1219, 1.0
    %v1222 = vadd.f32 %v1220, 1.0
    %v1223 = vmul.f32 %v1145, %v1221
    %v1224 = vmul.f32 %v1146, %v1222
    %v1225 = vpack.c.bf16 %v1224, %v1223
    %s1226 = scalar_lea.vmem %s12, 32
    %v1227 = vld [vmem:[%s1226] sm:$0xf]
    %v1228 = vld [vmem:[%s1226 + $0x4] sm:$0xf]
    %v1229 = vld [vmem:[%s1226 + $0x8] sm:$0xf]
    %v1230 = vld [vmem:[%s1226 + $0xc] sm:$0xf]
    %v1231 = vld [vmem:[%s1226 + $0x10] sm:$0xf]
    %v1232 = vld [vmem:[%s1226 + $0x14] sm:$0xf]
    %v1233 = vld [vmem:[%s1226 + $0x18] sm:$0xf]
    %v1234 = vld [vmem:[%s1226 + $0x1c] sm:$0xf]
    %s1235 = scalar_lea.vmem %s13, 1
    %v1236 = vld [vmem:[%s1235] sm:$0x1]
    %v1238 = vperm.slane %v1236, 0
    %v1248 = vunpack.c.l.b16 %v1227
    %v1249 = vunpack.c.l.b16 %v1228
    %v1250 = vunpack.c.l.b16 %v1229
    %v1251 = vunpack.c.l.b16 %v1230
    %v1252 = vunpack.c.l.b16 %v1231
    %v1253 = vunpack.c.l.b16 %v1232
    %v1254 = vunpack.c.l.b16 %v1233
    %v1255 = vunpack.c.l.b16 %v1234
    %v1256 = vpack.c.b16 %v1249, %v1248
    %v1257 = vpack.c.b16 %v1251, %v1250
    %v1258 = vpack.c.b16 %v1253, %v1252
    %v1259 = vpack.c.b16 %v1255, %v1254
    %v1265 = vsel %vm657, %v1225, 0
    %1267 = vmatpush.bf16.msra.mxu0 0
    %1268 = vmatpush.bf16.msra.mxu0 0
    %1269 = vmatpush.bf16.msra.mxu0 0
    %1270 = vmatpush.bf16.msra.mxu0 0
    %1271 = vmatpush.bf16.msra.mxu0 %v1259
    %1272 = vmatpush.bf16.msra.mxu0 %v1258
    %1273 = vmatpush.bf16.msra.mxu0 %v1257
    %1274 = vmatpush.bf16.msra.mxu0 %v1256
    %1275 = vmatmul.bf16.gmra.mxu0 %v1265
    %v1276 = vpop.f32.mrf.mxu0
    %v1277 = vadd.f32 %v1238, %v1276
    %v1278 = vpop.f32.mrf.mxu0
    %v1279 = vadd.f32 %v1238, %v1278
    %1280 = vdwg.mxu0
    %v1281 = vadd.f32 %v1103, %v1277
    %v1282 = vadd.f32 %v1104, %v1279
    %s1283 = scalar_lea.vmem %s14, 1
    %v1284 = vld [vmem:[%s1283] sm:$0x1]
    %s1285 = scalar_lea.vmem %s15, 1
    %v1286 = vld [vmem:[%s1285] sm:$0x1]
    %v1287 = vsel %vm73, %v1281, 0.0
    %1288 = vadd.xlane.f32.xlu0 %v1287
    %v1289 = vpop.xlane.xlu0 %1288
    %v1290 = vsel %vm73, %v1282, 0.0
    %1291 = vadd.xlane.f32.xlu0 %v1290
    %v1292 = vpop.xlane.xlu0 %1291
    %v1293 = vmul.f32 %v1289, %v86
    %v1294 = vmul.f32 %v1292, %v86
    %v1295 = vsub.f32 %v1281, %v1293
    %v1296 = vsub.f32 %v1282, %v1294
    %v1297 = vmul.f32 %v1295, %v1295
    %v1298 = vmul.f32 %v1296, %v1296
    %v1299 = vsel %vm73, %v1297, 0.0
    %1300 = vadd.xlane.f32.xlu0 %v1299
    %v1301 = vpop.xlane.xlu0 %1300
    %v1302 = vsel %vm73, %v1298, 0.0
    %1303 = vadd.xlane.f32.xlu0 %v1302
    %v1304 = vpop.xlane.xlu0 %1303
    %v1305 = vmul.f32 %v1301, %v86
    %v1306 = vmul.f32 %v1304, %v86
    %v1307 = vadd.f32 %v1305, 1e-12
    %v1308 = vadd.f32 %v1306, 1e-12
    %v1309 = vrsqrt.pop %v1307
    %v1310 = vmul.f32 %v1309, %v1307
    %v1311 = vmul.f32 %v1310, %v1309
    %v1312 = vmul.f32 0.5, %v1311
    %v1313 = vsub.f32 1.5, %v1312
    %v1314 = vmul.f32 %v1309, %v1313
    %vm1315 = vweird.f32 %v1307
    %vm1316 = vweird.f32 %v1309
    %vm1317 = vmor %vm1315, %vm1316
    %v1318 = vsel %vm1317, %v1309, %v1314
    %v1319 = vrsqrt.pop %v1308
    %v1320 = vmul.f32 %v1319, %v1308
    %v1321 = vmul.f32 %v1320, %v1319
    %v1322 = vmul.f32 0.5, %v1321
    %v1323 = vsub.f32 1.5, %v1322
    %v1324 = vmul.f32 %v1319, %v1323
    %vm1325 = vweird.f32 %v1308
    %vm1326 = vweird.f32 %v1319
    %vm1327 = vmor %vm1325, %vm1326
    %v1328 = vsel %vm1327, %v1319, %v1324
    %v1329 = vmul.f32 %v1295, %v1318
    %v1330 = vmul.f32 %v1296, %v1328
    %v1332 = vperm.slane %v1284, 0
    %v1334 = vmul.f32 %v1329, %v1332
    %v1335 = vmul.f32 %v1330, %v1332
    %v1337 = vperm.slane %v1286, 0
    %v1339 = vadd.f32 %v1334, %v1337
    %v1340 = vadd.f32 %v1335, %v1337
    %v1342 = vrot.slane %v1340, 7
    %vm1344 = vcmask 1040384
    %v1345 = vsel %vm1344, %v1339, %v1342
    %v1346 = vpack.c.bf16 %v1345, %v1345
    %v1347 = vld [vmem:[%s16] sm:$0xf]
    %v1348 = vld [vmem:[%s16 + $0x4] sm:$0xf]
    %v1349 = vld [vmem:[%s16 + $0x8] sm:$0xf]
    %v1350 = vld [vmem:[%s16 + $0xc] sm:$0xf]
    %v1351 = vld [vmem:[%s17] sm:$0x1]
    %v1353 = vperm.slane %v1351, 0
    %v1359 = vunpack.c.l.b16 %v1347
    %v1360 = vunpack.c.l.b16 %v1348
    %v1361 = vunpack.c.l.b16 %v1349
    %v1362 = vunpack.c.l.b16 %v1350
    %v1363 = vpack.c.b16 %v1360, %v1359
    %v1364 = vpack.c.b16 %v1362, %v1361
    %v1368 = vsel %vm73, %v1346, 0
    %1370 = vmatpush.bf16.msra.mxu0 0
    %1371 = vmatpush.bf16.msra.mxu0 0
    %1372 = vmatpush.bf16.msra.mxu0 0
    %1373 = vmatpush.bf16.msra.mxu0 0
    %1374 = vmatpush.bf16.msra.mxu0 0
    %1375 = vmatpush.bf16.msra.mxu0 0
    %1376 = vmatpush.bf16.msra.mxu0 %v1364
    %1377 = vmatpush.bf16.msra.mxu0 %v1363
    %1378 = vmatmul.bf16.gmra.mxu0 %v1368
    %v1379 = vpop.f32.mrf.mxu0
    %v1380 = vadd.f32 %v1353, %v1379
    %v1381 = vpop.f32.mrf.mxu0
    %1382 = vdwg.mxu0
    %v1383 = vtanh.pop %v1380
    %v1384 = vpack.c.bf16 %v1383, %v1383
    %v1385 = vld [vmem:[%s18] sm:$0xf]
    %v1386 = vld [vmem:[%s18 + $0x4] sm:$0xf]
    %v1387 = vld [vmem:[%s18 + $0x8] sm:$0xf]
    %v1388 = vld [vmem:[%s18 + $0xc] sm:$0xf]
    %v1389 = vld [vmem:[%s19] sm:$0x1]
    %v1391 = vperm.slane %v1389, 0
    %v1397 = vunpack.c.l.b16 %v1385
    %v1398 = vunpack.c.l.b16 %v1386
    %v1399 = vunpack.c.l.b16 %v1387
    %v1400 = vunpack.c.l.b16 %v1388
    %v1401 = vpack.c.b16 %v1398, %v1397
    %v1402 = vpack.c.b16 %v1400, %v1399
    %v1406 = vsel %vm73, %v1384, 0
    %1408 = vmatpush.bf16.msra.mxu0 0
    %1409 = vmatpush.bf16.msra.mxu0 0
    %1410 = vmatpush.bf16.msra.mxu0 0
    %1411 = vmatpush.bf16.msra.mxu0 0
    %1412 = vmatpush.bf16.msra.mxu0 0
    %1413 = vmatpush.bf16.msra.mxu0 0
    %1414 = vmatpush.bf16.msra.mxu0 %v1402
    %1415 = vmatpush.bf16.msra.mxu0 %v1401
    %1416 = vmatmul.bf16.gmra.mxu0 %v1406
    %v1417 = vpop.f32.mrf.mxu0
    %v1418 = vadd.f32 %v1391, %v1417
    %v1419 = vpop.f32.mrf.mxu0
    %1420 = vdwg.mxu0
    %vm1421 = vcmask 9216
    %1422 = vst.msk [vmem:[#allocation2] sm:$0x3] %vm1421, %v1418
    // Predicated region
    $region82: #{mybert_forward.1} parent=1 // pred_check
      _
    $region83: #{mybert_forward.1} parent=1 // pred_check_branch
      %1424 = sbr.rel (0) target = $region85
    $region84: #{mybert_forward.1} parent=1 // pred_region
      %1426 = vsyncadd [#allocation3], 0
      %s1428 = sshll.u32 [#allocation2], 4
      %s1429 = int_to_ptr.vmem [resolvable:$true] %s1428
      %s1430 = sshll.u32 %s20, 4
      %s1431 = int_to_ptr.hbm [resolvable:$true] %s1430
      %1433 = dma.vmem_to_hbm [thread:$0]  %s1429, 32, %s1431, [#allocation3]
    $region85: #{mybert_forward.1} parent=1 // pred_fallthru
      _
    // Predicated region
    $region86: #{mybert_forward.1} parent=1 // pred_check
      _
    $region87: #{mybert_forward.1} parent=1 // pred_check_branch
      %1435 = sbr.rel (0) target = $region89
    $region88: #{mybert_forward.1} parent=1 // pred_region
      %1437 = dma.done [#allocation3], 32
    $region89: #{mybert_forward.1} parent=1 // pred_fallthru
      _
    %1438 = vsyncpa [#allocation3], 1

</llo_original>
